<compile_context>
chip_gen: v7x
topology: tpu7x:2x2x1
jax: 0.10.0
libtpu: 0.0.40
codegen_flags: <defaults>
</compile_context>

<pallas_src>
import functools
import math

import jax
import jax.numpy as jnp
from jax.experimental import pallas as pl
from jax.experimental.pallas import tpu as pltpu


def _pointer_decoder_kernel(nhead, n_batch, d_model,
                            mem_ref, tgt_ref, mask_ref,
                            wq_ref, wk_ref, wv_ref,
                            bq_ref, bk_ref, bv_ref,
                            wo_ref, bo_ref, wfc_ref, bfc_ref,
                            out_ref):
    L = mem_ref.shape[0]
    S = tgt_ref.shape[0]
    hd = d_model // nhead

    # Additive key-padding bias, computed ONCE. Large finite negative instead
    # of -inf avoids NaN on fully-masked rows.
    bias = jnp.where(mask_ref[...] > 0.5, -1e30, 0.0)            # [N, S] f32

    mem = mem_ref[...].astype(jnp.bfloat16)                      # [L, N*E]
    tgt = tgt_ref[...].astype(jnp.bfloat16)                      # [S, N*E]

    # Fused (batch-block-diagonal) in-projections: 3 MXU dots total.
    # 1/sqrt(hd) is folded into wq/bq at prep time.
    q = jnp.dot(mem, wq_ref[...], preferred_element_type=jnp.float32) + bq_ref[...]
    k = jnp.dot(tgt, wk_ref[...], preferred_element_type=jnp.float32) + bk_ref[...]
    v = jnp.dot(tgt, wv_ref[...], preferred_element_type=jnp.float32) + bv_ref[...]
    q = q.astype(jnp.bfloat16)                                   # [L, N*E]
    k = k.astype(jnp.bfloat16)                                   # [S, N*E]
    v = v.astype(jnp.bfloat16)                                   # [S, N*E]

    heads = []
    for n in range(n_batch):                                     # static: N tiny
        # Hoisted broadcast: one [1,S]->[L,S] materialization per batch element.
        bias_n = jnp.broadcast_to(bias[n:n + 1, :], (L, S))
        for h in range(nhead):                                   # static unroll
            off = n * d_model + h * hd
            qh = q[:, off:off + hd]                              # lane slices,
            kh = k[:, off:off + hd]                              # all within one
            vh = v[:, off:off + hd]                              # (8,128) tile
            # q @ k.T via dot_general dimension numbers (no materialized transpose)
            s = jax.lax.dot_general(qh, kh, (((1,), (1,)), ((), ())),
                                    preferred_element_type=jnp.float32) + bias_n
            m = jnp.max(s, axis=-1, keepdims=True)
            e = jnp.exp(s - m)
            p = e * pl.reciprocal(jnp.sum(e, axis=-1, keepdims=True), approx=True)
            heads.append(jnp.dot(p.astype(jnp.bfloat16), vh,
                                 preferred_element_type=jnp.float32))   # [L, hd]

    # Lane-concatenate heads (batch-major, head-minor -> matches the
    # block-diagonal out-projection / fc weights).
    attn = jnp.concatenate(heads, axis=-1).astype(jnp.bfloat16)         # [L, N*E]

    out = jnp.dot(attn, wo_ref[...], preferred_element_type=jnp.float32) + bo_ref[...]
    logits = jnp.dot(out.astype(jnp.bfloat16), wfc_ref[...],
                     preferred_element_type=jnp.float32) + bfc_ref[...]  # [L, N*V]

    # F.softmax with no `dim` on a 3-D tensor => softmax over dim 0 (seq axis).
    # It is column-wise, so all batch elements normalize in one pass; single
    # lane-dense full-tile store.
    m0 = jnp.max(logits, axis=0, keepdims=True)
    e0 = jnp.exp(logits - m0)
    out_ref[...] = e0 * pl.reciprocal(jnp.sum(e0, axis=0, keepdims=True), approx=True)


def pointer_decoder(memory, tgt, key_padding_mask, params, nhead):
    """memory/tgt: [L, N, E]/[S, N, E] (seq-first, like torch). Returns [L, N, V]."""
    L, N, E = memory.shape
    S = tgt.shape[0]
    V = params["fc_w"].shape[0]
    hd = E // nhead
    scale = 1.0 / math.sqrt(hd)

    wq, wk, wv = jnp.split(params["in_proj_w"], 3, axis=0)       # each [E, E]
    bq, bk, bv = jnp.split(params["in_proj_b"], 3)               # each [E]

    def bdiag(w):
        # [P, Q] -> [N*P, N*Q] batch-block-diagonal replication (one-time prep).
        P, Q = w.shape
        out = jnp.zeros((N * P, N * Q), w.dtype)
        for n in range(N):
            out = out.at[n * P:(n + 1) * P, n * Q:(n + 1) * Q].set(w)
        return out

    wq_bd = bdiag(wq.T * scale).astype(jnp.bfloat16)             # scale folded
    wk_bd = bdiag(wk.T).astype(jnp.bfloat16)
    wv_bd = bdiag(wv.T).astype(jnp.bfloat16)
    bq_bd = jnp.tile(bq * scale, N).reshape(1, N * E)            # f32 biases
    bk_bd = jnp.tile(bk, N).reshape(1, N * E)
    bv_bd = jnp.tile(bv, N).reshape(1, N * E)
    wo_bd = bdiag(params["out_proj_w"].T).astype(jnp.bfloat16)   # [N*E, N*E]
    bo_bd = jnp.tile(params["out_proj_b"], N).reshape(1, N * E)
    wfc_bd = bdiag(params["fc_w"].T).astype(jnp.bfloat16)        # [N*E, N*V]
    bfc_bd = jnp.tile(params["fc_b"], N).reshape(1, N * V)

    # Free row-major reshapes: batch flattened into the lane axis.
    mem_flat = memory.astype(jnp.float32).reshape(L, N * E)
    tgt_flat = tgt.astype(jnp.float32).reshape(S, N * E)
    mask_f = key_padding_mask.astype(jnp.float32)

    args = (mem_flat, tgt_flat, mask_f,
            wq_bd, wk_bd, wv_bd, bq_bd, bk_bd, bv_bd,
            wo_bd, bo_bd, wfc_bd, bfc_bd)

    def full_spec(a):
        nd = a.ndim
        return pl.BlockSpec(a.shape, lambda i, _nd=nd: (0,) * _nd)

    out_flat = pl.pallas_call(
        functools.partial(_pointer_decoder_kernel, nhead, N, E),
        out_shape=jax.ShapeDtypeStruct((L, N * V), jnp.float32),
        grid=(1,),                                               # overhead-bound: one step
        in_specs=[full_spec(a) for a in args],
        out_specs=pl.BlockSpec((L, N * V), lambda i: (0, 0)),
        compiler_params=pltpu.CompilerParams(dimension_semantics=("arbitrary",)),
    )(*args)
    return out_flat.reshape(L, N, V)


def reference(memory, tgt, mask, params, nhead):
    """Pure-JAX f32 reference of the PyTorch forward (for validation)."""
    L, N, E = memory.shape
    S = tgt.shape[0]
    wq, wk, wv = jnp.split(params["in_proj_w"], 3, axis=0)
    bq, bk, bv = jnp.split(params["in_proj_b"], 3)
    q = jnp.einsum("lne,fe->lnf", memory, wq) + bq
    k = jnp.einsum("sne,fe->snf", tgt, wk) + bk
    v = jnp.einsum("sne,fe->snf", tgt, wv) + bv
    hd = E // nhead
    q = q.reshape(L, N, nhead, hd).transpose(1, 2, 0, 3)
    k = k.reshape(S, N, nhead, hd).transpose(1, 2, 0, 3)
    v = v.reshape(S, N, nhead, hd).transpose(1, 2, 0, 3)
    s = jnp.einsum("nhld,nhsd->nhls", q, k) / math.sqrt(hd)
    s = jnp.where(mask[:, None, None, :] > 0.5, -jnp.inf, s)
    p = jax.nn.softmax(s, axis=-1)
    a = jnp.einsum("nhls,nhsd->nhld", p, v).transpose(2, 0, 1, 3).reshape(L, N, E)
    out = a @ params["out_proj_w"].T + params["out_proj_b"]
    logits = out @ params["fc_w"].T + params["fc_b"]
    return jax.nn.softmax(logits, axis=0)   # F.softmax default on 3-D => dim 0


if __name__ == "__main__":
    # cfg: d_model=32, nhead=4, tgt_vocab_size=16; seq=8, batch=2
    L = S = 8
    N = 2
    E = 32
    H = 4
    V = 16

    key = jax.random.PRNGKey(0)
    ks = jax.random.split(key, 8)
    memory = jax.random.normal(ks[0], (L, N, E), jnp.float32)
    tgt = jax.random.normal(ks[1], (S, N, E), jnp.float32)
    # key padding mask [N, S]: last two key positions masked for every batch
    mask = jnp.zeros((N, S), jnp.float32).at[:, -2:].set(1.0)

    params = {
        "in_proj_w": 0.1 * jax.random.normal(ks[2], (3 * E, E), jnp.float32),
        "in_proj_b": 0.1 * jax.random.normal(ks[3], (3 * E,), jnp.float32),
        "out_proj_w": 0.1 * jax.random.normal(ks[4], (E, E), jnp.float32),
        "out_proj_b": 0.1 * jax.random.normal(ks[5], (E,), jnp.float32),
        "fc_w": 0.1 * jax.random.normal(ks[6], (V, E), jnp.float32),
        "fc_b": 0.1 * jax.random.normal(ks[7], (V,), jnp.float32),
    }

    out = pointer_decoder(memory, tgt, mask, params, nhead=H)
    out = jax.block_until_ready(out)

    ref = reference(memory, tgt, mask, params, H)
    assert out.shape == (L, N, V), out.shape
    # bf16 matmul operands + approx reciprocal consume part of the tolerance
    # budget; outputs are softmax probabilities so 5e-3 is still a tight check.
    assert jnp.allclose(out, ref, atol=5e-3, rtol=5e-3), "mismatch vs reference"
    print("KERNEL_OK")
</pallas_src>

<mosaic_0001>
module attributes {stable_mosaic.version = 11 : i64} {
  func.func @_pointer_decoder_kernel(%arg0: i32, %arg1: memref<8x64xf32, #tpu.memory_space<vmem>>, %arg2: memref<8x64xf32, #tpu.memory_space<vmem>>, %arg3: memref<2x8xf32, #tpu.memory_space<vmem>>, %arg4: memref<64x64xbf16, #tpu.memory_space<vmem>>, %arg5: memref<64x64xbf16, #tpu.memory_space<vmem>>, %arg6: memref<64x64xbf16, #tpu.memory_space<vmem>>, %arg7: memref<1x64xf32, #tpu.memory_space<vmem>>, %arg8: memref<1x64xf32, #tpu.memory_space<vmem>>, %arg9: memref<1x64xf32, #tpu.memory_space<vmem>>, %arg10: memref<64x64xbf16, #tpu.memory_space<vmem>>, %arg11: memref<1x64xf32, #tpu.memory_space<vmem>>, %arg12: memref<64x32xbf16, #tpu.memory_space<vmem>>, %arg13: memref<1x32xf32, #tpu.memory_space<vmem>>, %arg14: memref<8x32xf32, #tpu.memory_space<vmem>>) attributes {dimension_semantics = [#tpu.dimension_semantics<arbitrary>], iteration_bounds = array<i64: 1>, scalar_prefetch = 0 : i64, scratch_operands = 0 : i64, tpu.core_type = #tpu.core_type<tc>, window_params = [{pipeline_mode = #tpu.pipeline_mode<synchronous>, transform_indices = @transform_0, window_bounds = array<i64: 8, 64>}, {pipeline_mode = #tpu.pipeline_mode<synchronous>, transform_indices = @transform_1, window_bounds = array<i64: 8, 64>}, {pipeline_mode = #tpu.pipeline_mode<synchronous>, transform_indices = @transform_2, window_bounds = array<i64: 2, 8>}, {pipeline_mode = #tpu.pipeline_mode<synchronous>, transform_indices = @transform_3, window_bounds = array<i64: 64, 64>}, {pipeline_mode = #tpu.pipeline_mode<synchronous>, transform_indices = @transform_4, window_bounds = array<i64: 64, 64>}, {pipeline_mode = #tpu.pipeline_mode<synchronous>, transform_indices = @transform_5, window_bounds = array<i64: 64, 64>}, {pipeline_mode = #tpu.pipeline_mode<synchronous>, transform_indices = @transform_6, window_bounds = array<i64: 1, 64>}, {pipeline_mode = #tpu.pipeline_mode<synchronous>, transform_indices = @transform_7, window_bounds = array<i64: 1, 64>}, {pipeline_mode = #tpu.pipeline_mode<synchronous>, transform_indices = @transform_8, window_bounds = array<i64: 1, 64>}, {pipeline_mode = #tpu.pipeline_mode<synchronous>, transform_indices = @transform_9, window_bounds = array<i64: 64, 64>}, {pipeline_mode = #tpu.pipeline_mode<synchronous>, transform_indices = @transform_10, window_bounds = array<i64: 1, 64>}, {pipeline_mode = #tpu.pipeline_mode<synchronous>, transform_indices = @transform_11, window_bounds = array<i64: 64, 32>}, {pipeline_mode = #tpu.pipeline_mode<synchronous>, transform_indices = @transform_12, window_bounds = array<i64: 1, 32>}, {pipeline_mode = #tpu.pipeline_mode<synchronous>, transform_indices = @transform_13, window_bounds = array<i64: 8, 32>}]} {
    %c0 = arith.constant 0 : index
    %c0_0 = arith.constant 0 : index
    %0 = vector.load %arg3[%c0, %c0_0] : memref<2x8xf32, #tpu.memory_space<vmem>>, vector<2x8xf32>
    %cst = arith.constant 5.000000e-01 : f32
    %1 = vector.broadcast %cst : f32 to vector<2x8xf32>
    %2 = arith.cmpf ogt, %0, %1 : vector<2x8xf32>
    %cst_1 = arith.constant -1.000000e+30 : f32
    %cst_2 = arith.constant 0.000000e+00 : f32
    %3 = vector.broadcast %cst_1 : f32 to vector<2x8xf32>
    %4 = vector.broadcast %cst_2 : f32 to vector<2x8xf32>
    %5 = arith.select %2, %3, %4 : vector<2x8xi1>, vector<2x8xf32>
    %c0_3 = arith.constant 0 : index
    %c0_4 = arith.constant 0 : index
    %6 = vector.load %arg1[%c0_3, %c0_4] : memref<8x64xf32, #tpu.memory_space<vmem>>, vector<8x64xf32>
    %7 = arith.truncf %6 : vector<8x64xf32> to vector<8x64xbf16>
    %c0_5 = arith.constant 0 : index
    %c0_6 = arith.constant 0 : index
    %8 = vector.load %arg2[%c0_5, %c0_6] : memref<8x64xf32, #tpu.memory_space<vmem>>, vector<8x64xf32>
    %9 = arith.truncf %8 : vector<8x64xf32> to vector<8x64xbf16>
    %c0_7 = arith.constant 0 : index
    %c0_8 = arith.constant 0 : index
    %10 = vector.load %arg4[%c0_7, %c0_8] : memref<64x64xbf16, #tpu.memory_space<vmem>>, vector<64x64xbf16>
    %cst_9 = arith.constant dense<0.000000e+00> : vector<8x64xf32>
    %11 = tpu.matmul %7, %10, %cst_9 {dimension_numbers = #tpu.dot_dimension_numbers<[1], [0], [0], [1], [0, 0, 1, 1], [], []>} : vector<8x64xbf16>, vector<64x64xbf16>, vector<8x64xf32> -> vector<8x64xf32>
    %c0_10 = arith.constant 0 : index
    %c0_11 = arith.constant 0 : index
    %12 = vector.load %arg7[%c0_10, %c0_11] : memref<1x64xf32, #tpu.memory_space<vmem>>, vector<1x64xf32>
    %13 = vector.broadcast %12 : vector<1x64xf32> to vector<8x64xf32>
    %14 = arith.addf %11, %13 : vector<8x64xf32>
    %c0_12 = arith.constant 0 : index
    %c0_13 = arith.constant 0 : index
    %15 = vector.load %arg5[%c0_12, %c0_13] : memref<64x64xbf16, #tpu.memory_space<vmem>>, vector<64x64xbf16>
    %cst_14 = arith.constant dense<0.000000e+00> : vector<8x64xf32>
    %16 = tpu.matmul %9, %15, %cst_14 {dimension_numbers = #tpu.dot_dimension_numbers<[1], [0], [0], [1], [0, 0, 1, 1], [], []>} : vector<8x64xbf16>, vector<64x64xbf16>, vector<8x64xf32> -> vector<8x64xf32>
    %c0_15 = arith.constant 0 : index
    %c0_16 = arith.constant 0 : index
    %17 = vector.load %arg8[%c0_15, %c0_16] : memref<1x64xf32, #tpu.memory_space<vmem>>, vector<1x64xf32>
    %18 = vector.broadcast %17 : vector<1x64xf32> to vector<8x64xf32>
    %19 = arith.addf %16, %18 : vector<8x64xf32>
    %c0_17 = arith.constant 0 : index
    %c0_18 = arith.constant 0 : index
    %20 = vector.load %arg6[%c0_17, %c0_18] : memref<64x64xbf16, #tpu.memory_space<vmem>>, vector<64x64xbf16>
    %cst_19 = arith.constant dense<0.000000e+00> : vector<8x64xf32>
    %21 = tpu.matmul %9, %20, %cst_19 {dimension_numbers = #tpu.dot_dimension_numbers<[1], [0], [0], [1], [0, 0, 1, 1], [], []>} : vector<8x64xbf16>, vector<64x64xbf16>, vector<8x64xf32> -> vector<8x64xf32>
    %c0_20 = arith.constant 0 : index
    %c0_21 = arith.constant 0 : index
    %22 = vector.load %arg9[%c0_20, %c0_21] : memref<1x64xf32, #tpu.memory_space<vmem>>, vector<1x64xf32>
    %23 = vector.broadcast %22 : vector<1x64xf32> to vector<8x64xf32>
    %24 = arith.addf %21, %23 : vector<8x64xf32>
    %25 = arith.truncf %14 : vector<8x64xf32> to vector<8x64xbf16>
    %26 = arith.truncf %19 : vector<8x64xf32> to vector<8x64xbf16>
    %27 = arith.truncf %24 : vector<8x64xf32> to vector<8x64xbf16>
    %28 = vector.extract_strided_slice %5 {offsets = [0, 0], sizes = [1, 8], strides = [1, 1]} : vector<2x8xf32> to vector<1x8xf32>
    %29 = vector.shape_cast %28 : vector<1x8xf32> to vector<1x8xf32>
    %30 = vector.broadcast %29 : vector<1x8xf32> to vector<8x8xf32>
    %31 = vector.extract_strided_slice %25 {offsets = [0, 0], sizes = [8, 8], strides = [1, 1]} : vector<8x64xbf16> to vector<8x8xbf16>
    %32 = vector.extract_strided_slice %26 {offsets = [0, 0], sizes = [8, 8], strides = [1, 1]} : vector<8x64xbf16> to vector<8x8xbf16>
    %33 = vector.extract_strided_slice %27 {offsets = [0, 0], sizes = [8, 8], strides = [1, 1]} : vector<8x64xbf16> to vector<8x8xbf16>
    %cst_22 = arith.constant dense<0.000000e+00> : vector<8x8xf32>
    %34 = tpu.matmul %31, %32, %cst_22 {dimension_numbers = #tpu.dot_dimension_numbers<[1], [1], [0], [0], [0, 0, 1, 0], [], []>} : vector<8x8xbf16>, vector<8x8xbf16>, vector<8x8xf32> -> vector<8x8xf32>
    %35 = arith.addf %34, %30 : vector<8x8xf32>
    %cst_23 = arith.constant dense<0xFF800000> : vector<8xf32>
    %36 = vector.multi_reduction <maximumf>, %35, %cst_23 [1] : vector<8x8xf32> to vector<8xf32>
    %37 = vector.shape_cast %36 : vector<8xf32> to vector<8x1xf32>
    %38 = vector.broadcast %37 : vector<8x1xf32> to vector<8x8xf32>
    %39 = arith.subf %35, %38 : vector<8x8xf32>
    %40 = math.exp %39 : vector<8x8xf32>
    %cst_24 = arith.constant dense<0.000000e+00> : vector<8xf32>
    %41 = vector.multi_reduction <add>, %40, %cst_24 [1] : vector<8x8xf32> to vector<8xf32>
    %42 = vector.shape_cast %41 : vector<8xf32> to vector<8x1xf32>
    %43 = tpu.reciprocal %42 {approx = true} : vector<8x1xf32> -> vector<8x1xf32>
    %44 = vector.broadcast %43 : vector<8x1xf32> to vector<8x8xf32>
    %45 = arith.mulf %40, %44 : vector<8x8xf32>
    %46 = arith.truncf %45 : vector<8x8xf32> to vector<8x8xbf16>
    %cst_25 = arith.constant dense<0.000000e+00> : vector<8x8xf32>
    %47 = tpu.matmul %46, %33, %cst_25 {dimension_numbers = #tpu.dot_dimension_numbers<[1], [0], [0], [1], [0, 0, 1, 1], [], []>} : vector<8x8xbf16>, vector<8x8xbf16>, vector<8x8xf32> -> vector<8x8xf32>
    %48 = vector.extract_strided_slice %25 {offsets = [0, 8], sizes = [8, 8], strides = [1, 1]} : vector<8x64xbf16> to vector<8x8xbf16>
    %49 = vector.extract_strided_slice %26 {offsets = [0, 8], sizes = [8, 8], strides = [1, 1]} : vector<8x64xbf16> to vector<8x8xbf16>
    %50 = vector.extract_strided_slice %27 {offsets = [0, 8], sizes = [8, 8], strides = [1, 1]} : vector<8x64xbf16> to vector<8x8xbf16>
    %cst_26 = arith.constant dense<0.000000e+00> : vector<8x8xf32>
    %51 = tpu.matmul %48, %49, %cst_26 {dimension_numbers = #tpu.dot_dimension_numbers<[1], [1], [0], [0], [0, 0, 1, 0], [], []>} : vector<8x8xbf16>, vector<8x8xbf16>, vector<8x8xf32> -> vector<8x8xf32>
    %52 = arith.addf %51, %30 : vector<8x8xf32>
    %cst_27 = arith.constant dense<0xFF800000> : vector<8xf32>
    %53 = vector.multi_reduction <maximumf>, %52, %cst_27 [1] : vector<8x8xf32> to vector<8xf32>
    %54 = vector.shape_cast %53 : vector<8xf32> to vector<8x1xf32>
    %55 = vector.broadcast %54 : vector<8x1xf32> to vector<8x8xf32>
    %56 = arith.subf %52, %55 : vector<8x8xf32>
    %57 = math.exp %56 : vector<8x8xf32>
    %cst_28 = arith.constant dense<0.000000e+00> : vector<8xf32>
    %58 = vector.multi_reduction <add>, %57, %cst_28 [1] : vector<8x8xf32> to vector<8xf32>
    %59 = vector.shape_cast %58 : vector<8xf32> to vector<8x1xf32>
    %60 = tpu.reciprocal %59 {approx = true} : vector<8x1xf32> -> vector<8x1xf32>
    %61 = vector.broadcast %60 : vector<8x1xf32> to vector<8x8xf32>
    %62 = arith.mulf %57, %61 : vector<8x8xf32>
    %63 = arith.truncf %62 : vector<8x8xf32> to vector<8x8xbf16>
    %cst_29 = arith.constant dense<0.000000e+00> : vector<8x8xf32>
    %64 = tpu.matmul %63, %50, %cst_29 {dimension_numbers = #tpu.dot_dimension_numbers<[1], [0], [0], [1], [0, 0, 1, 1], [], []>} : vector<8x8xbf16>, vector<8x8xbf16>, vector<8x8xf32> -> vector<8x8xf32>
    %65 = vector.extract_strided_slice %25 {offsets = [0, 16], sizes = [8, 8], strides = [1, 1]} : vector<8x64xbf16> to vector<8x8xbf16>
    %66 = vector.extract_strided_slice %26 {offsets = [0, 16], sizes = [8, 8], strides = [1, 1]} : vector<8x64xbf16> to vector<8x8xbf16>
    %67 = vector.extract_strided_slice %27 {offsets = [0, 16], sizes = [8, 8], strides = [1, 1]} : vector<8x64xbf16> to vector<8x8xbf16>
    %cst_30 = arith.constant dense<0.000000e+00> : vector<8x8xf32>
    %68 = tpu.matmul %65, %66, %cst_30 {dimension_numbers = #tpu.dot_dimension_numbers<[1], [1], [0], [0], [0, 0, 1, 0], [], []>} : vector<8x8xbf16>, vector<8x8xbf16>, vector<8x8xf32> -> vector<8x8xf32>
    %69 = arith.addf %68, %30 : vector<8x8xf32>
    %cst_31 = arith.constant dense<0xFF800000> : vector<8xf32>
    %70 = vector.multi_reduction <maximumf>, %69, %cst_31 [1] : vector<8x8xf32> to vector<8xf32>
    %71 = vector.shape_cast %70 : vector<8xf32> to vector<8x1xf32>
    %72 = vector.broadcast %71 : vector<8x1xf32> to vector<8x8xf32>
    %73 = arith.subf %69, %72 : vector<8x8xf32>
    %74 = math.exp %73 : vector<8x8xf32>
    %cst_32 = arith.constant dense<0.000000e+00> : vector<8xf32>
    %75 = vector.multi_reduction <add>, %74, %cst_32 [1] : vector<8x8xf32> to vector<8xf32>
    %76 = vector.shape_cast %75 : vector<8xf32> to vector<8x1xf32>
    %77 = tpu.reciprocal %76 {approx = true} : vector<8x1xf32> -> vector<8x1xf32>
    %78 = vector.broadcast %77 : vector<8x1xf32> to vector<8x8xf32>
    %79 = arith.mulf %74, %78 : vector<8x8xf32>
    %80 = arith.truncf %79 : vector<8x8xf32> to vector<8x8xbf16>
    %cst_33 = arith.constant dense<0.000000e+00> : vector<8x8xf32>
    %81 = tpu.matmul %80, %67, %cst_33 {dimension_numbers = #tpu.dot_dimension_numbers<[1], [0], [0], [1], [0, 0, 1, 1], [], []>} : vector<8x8xbf16>, vector<8x8xbf16>, vector<8x8xf32> -> vector<8x8xf32>
    %82 = vector.extract_strided_slice %25 {offsets = [0, 24], sizes = [8, 8], strides = [1, 1]} : vector<8x64xbf16> to vector<8x8xbf16>
    %83 = vector.extract_strided_slice %26 {offsets = [0, 24], sizes = [8, 8], strides = [1, 1]} : vector<8x64xbf16> to vector<8x8xbf16>
    %84 = vector.extract_strided_slice %27 {offsets = [0, 24], sizes = [8, 8], strides = [1, 1]} : vector<8x64xbf16> to vector<8x8xbf16>
    %cst_34 = arith.constant dense<0.000000e+00> : vector<8x8xf32>
    %85 = tpu.matmul %82, %83, %cst_34 {dimension_numbers = #tpu.dot_dimension_numbers<[1], [1], [0], [0], [0, 0, 1, 0], [], []>} : vector<8x8xbf16>, vector<8x8xbf16>, vector<8x8xf32> -> vector<8x8xf32>
    %86 = arith.addf %85, %30 : vector<8x8xf32>
    %cst_35 = arith.constant dense<0xFF800000> : vector<8xf32>
    %87 = vector.multi_reduction <maximumf>, %86, %cst_35 [1] : vector<8x8xf32> to vector<8xf32>
    %88 = vector.shape_cast %87 : vector<8xf32> to vector<8x1xf32>
    %89 = vector.broadcast %88 : vector<8x1xf32> to vector<8x8xf32>
    %90 = arith.subf %86, %89 : vector<8x8xf32>
    %91 = math.exp %90 : vector<8x8xf32>
    %cst_36 = arith.constant dense<0.000000e+00> : vector<8xf32>
    %92 = vector.multi_reduction <add>, %91, %cst_36 [1] : vector<8x8xf32> to vector<8xf32>
    %93 = vector.shape_cast %92 : vector<8xf32> to vector<8x1xf32>
    %94 = tpu.reciprocal %93 {approx = true} : vector<8x1xf32> -> vector<8x1xf32>
    %95 = vector.broadcast %94 : vector<8x1xf32> to vector<8x8xf32>
    %96 = arith.mulf %91, %95 : vector<8x8xf32>
    %97 = arith.truncf %96 : vector<8x8xf32> to vector<8x8xbf16>
    %cst_37 = arith.constant dense<0.000000e+00> : vector<8x8xf32>
    %98 = tpu.matmul %97, %84, %cst_37 {dimension_numbers = #tpu.dot_dimension_numbers<[1], [0], [0], [1], [0, 0, 1, 1], [], []>} : vector<8x8xbf16>, vector<8x8xbf16>, vector<8x8xf32> -> vector<8x8xf32>
    %99 = vector.extract_strided_slice %5 {offsets = [1, 0], sizes = [1, 8], strides = [1, 1]} : vector<2x8xf32> to vector<1x8xf32>
    %100 = vector.shape_cast %99 : vector<1x8xf32> to vector<1x8xf32>
    %101 = vector.broadcast %100 : vector<1x8xf32> to vector<8x8xf32>
    %102 = vector.extract_strided_slice %25 {offsets = [0, 32], sizes = [8, 8], strides = [1, 1]} : vector<8x64xbf16> to vector<8x8xbf16>
    %103 = vector.extract_strided_slice %26 {offsets = [0, 32], sizes = [8, 8], strides = [1, 1]} : vector<8x64xbf16> to vector<8x8xbf16>
    %104 = vector.extract_strided_slice %27 {offsets = [0, 32], sizes = [8, 8], strides = [1, 1]} : vector<8x64xbf16> to vector<8x8xbf16>
    %cst_38 = arith.constant dense<0.000000e+00> : vector<8x8xf32>
    %105 = tpu.matmul %102, %103, %cst_38 {dimension_numbers = #tpu.dot_dimension_numbers<[1], [1], [0], [0], [0, 0, 1, 0], [], []>} : vector<8x8xbf16>, vector<8x8xbf16>, vector<8x8xf32> -> vector<8x8xf32>
    %106 = arith.addf %105, %101 : vector<8x8xf32>
    %cst_39 = arith.constant dense<0xFF800000> : vector<8xf32>
    %107 = vector.multi_reduction <maximumf>, %106, %cst_39 [1] : vector<8x8xf32> to vector<8xf32>
    %108 = vector.shape_cast %107 : vector<8xf32> to vector<8x1xf32>
    %109 = vector.broadcast %108 : vector<8x1xf32> to vector<8x8xf32>
    %110 = arith.subf %106, %109 : vector<8x8xf32>
    %111 = math.exp %110 : vector<8x8xf32>
    %cst_40 = arith.constant dense<0.000000e+00> : vector<8xf32>
    %112 = vector.multi_reduction <add>, %111, %cst_40 [1] : vector<8x8xf32> to vector<8xf32>
    %113 = vector.shape_cast %112 : vector<8xf32> to vector<8x1xf32>
    %114 = tpu.reciprocal %113 {approx = true} : vector<8x1xf32> -> vector<8x1xf32>
    %115 = vector.broadcast %114 : vector<8x1xf32> to vector<8x8xf32>
    %116 = arith.mulf %111, %115 : vector<8x8xf32>
    %117 = arith.truncf %116 : vector<8x8xf32> to vector<8x8xbf16>
    %cst_41 = arith.constant dense<0.000000e+00> : vector<8x8xf32>
    %118 = tpu.matmul %117, %104, %cst_41 {dimension_numbers = #tpu.dot_dimension_numbers<[1], [0], [0], [1], [0, 0, 1, 1], [], []>} : vector<8x8xbf16>, vector<8x8xbf16>, vector<8x8xf32> -> vector<8x8xf32>
    %119 = vector.extract_strided_slice %25 {offsets = [0, 40], sizes = [8, 8], strides = [1, 1]} : vector<8x64xbf16> to vector<8x8xbf16>
    %120 = vector.extract_strided_slice %26 {offsets = [0, 40], sizes = [8, 8], strides = [1, 1]} : vector<8x64xbf16> to vector<8x8xbf16>
    %121 = vector.extract_strided_slice %27 {offsets = [0, 40], sizes = [8, 8], strides = [1, 1]} : vector<8x64xbf16> to vector<8x8xbf16>
    %cst_42 = arith.constant dense<0.000000e+00> : vector<8x8xf32>
    %122 = tpu.matmul %119, %120, %cst_42 {dimension_numbers = #tpu.dot_dimension_numbers<[1], [1], [0], [0], [0, 0, 1, 0], [], []>} : vector<8x8xbf16>, vector<8x8xbf16>, vector<8x8xf32> -> vector<8x8xf32>
    %123 = arith.addf %122, %101 : vector<8x8xf32>
    %cst_43 = arith.constant dense<0xFF800000> : vector<8xf32>
    %124 = vector.multi_reduction <maximumf>, %123, %cst_43 [1] : vector<8x8xf32> to vector<8xf32>
    %125 = vector.shape_cast %124 : vector<8xf32> to vector<8x1xf32>
    %126 = vector.broadcast %125 : vector<8x1xf32> to vector<8x8xf32>
    %127 = arith.subf %123, %126 : vector<8x8xf32>
    %128 = math.exp %127 : vector<8x8xf32>
    %cst_44 = arith.constant dense<0.000000e+00> : vector<8xf32>
    %129 = vector.multi_reduction <add>, %128, %cst_44 [1] : vector<8x8xf32> to vector<8xf32>
    %130 = vector.shape_cast %129 : vector<8xf32> to vector<8x1xf32>
    %131 = tpu.reciprocal %130 {approx = true} : vector<8x1xf32> -> vector<8x1xf32>
    %132 = vector.broadcast %131 : vector<8x1xf32> to vector<8x8xf32>
    %133 = arith.mulf %128, %132 : vector<8x8xf32>
    %134 = arith.truncf %133 : vector<8x8xf32> to vector<8x8xbf16>
    %cst_45 = arith.constant dense<0.000000e+00> : vector<8x8xf32>
    %135 = tpu.matmul %134, %121, %cst_45 {dimension_numbers = #tpu.dot_dimension_numbers<[1], [0], [0], [1], [0, 0, 1, 1], [], []>} : vector<8x8xbf16>, vector<8x8xbf16>, vector<8x8xf32> -> vector<8x8xf32>
    %136 = vector.extract_strided_slice %25 {offsets = [0, 48], sizes = [8, 8], strides = [1, 1]} : vector<8x64xbf16> to vector<8x8xbf16>
    %137 = vector.extract_strided_slice %26 {offsets = [0, 48], sizes = [8, 8], strides = [1, 1]} : vector<8x64xbf16> to vector<8x8xbf16>
    %138 = vector.extract_strided_slice %27 {offsets = [0, 48], sizes = [8, 8], strides = [1, 1]} : vector<8x64xbf16> to vector<8x8xbf16>
    %cst_46 = arith.constant dense<0.000000e+00> : vector<8x8xf32>
    %139 = tpu.matmul %136, %137, %cst_46 {dimension_numbers = #tpu.dot_dimension_numbers<[1], [1], [0], [0], [0, 0, 1, 0], [], []>} : vector<8x8xbf16>, vector<8x8xbf16>, vector<8x8xf32> -> vector<8x8xf32>
    %140 = arith.addf %139, %101 : vector<8x8xf32>
    %cst_47 = arith.constant dense<0xFF800000> : vector<8xf32>
    %141 = vector.multi_reduction <maximumf>, %140, %cst_47 [1] : vector<8x8xf32> to vector<8xf32>
    %142 = vector.shape_cast %141 : vector<8xf32> to vector<8x1xf32>
    %143 = vector.broadcast %142 : vector<8x1xf32> to vector<8x8xf32>
    %144 = arith.subf %140, %143 : vector<8x8xf32>
    %145 = math.exp %144 : vector<8x8xf32>
    %cst_48 = arith.constant dense<0.000000e+00> : vector<8xf32>
    %146 = vector.multi_reduction <add>, %145, %cst_48 [1] : vector<8x8xf32> to vector<8xf32>
    %147 = vector.shape_cast %146 : vector<8xf32> to vector<8x1xf32>
    %148 = tpu.reciprocal %147 {approx = true} : vector<8x1xf32> -> vector<8x1xf32>
    %149 = vector.broadcast %148 : vector<8x1xf32> to vector<8x8xf32>
    %150 = arith.mulf %145, %149 : vector<8x8xf32>
    %151 = arith.truncf %150 : vector<8x8xf32> to vector<8x8xbf16>
    %cst_49 = arith.constant dense<0.000000e+00> : vector<8x8xf32>
    %152 = tpu.matmul %151, %138, %cst_49 {dimension_numbers = #tpu.dot_dimension_numbers<[1], [0], [0], [1], [0, 0, 1, 1], [], []>} : vector<8x8xbf16>, vector<8x8xbf16>, vector<8x8xf32> -> vector<8x8xf32>
    %153 = vector.extract_strided_slice %25 {offsets = [0, 56], sizes = [8, 8], strides = [1, 1]} : vector<8x64xbf16> to vector<8x8xbf16>
    %154 = vector.extract_strided_slice %26 {offsets = [0, 56], sizes = [8, 8], strides = [1, 1]} : vector<8x64xbf16> to vector<8x8xbf16>
    %155 = vector.extract_strided_slice %27 {offsets = [0, 56], sizes = [8, 8], strides = [1, 1]} : vector<8x64xbf16> to vector<8x8xbf16>
    %cst_50 = arith.constant dense<0.000000e+00> : vector<8x8xf32>
    %156 = tpu.matmul %153, %154, %cst_50 {dimension_numbers = #tpu.dot_dimension_numbers<[1], [1], [0], [0], [0, 0, 1, 0], [], []>} : vector<8x8xbf16>, vector<8x8xbf16>, vector<8x8xf32> -> vector<8x8xf32>
    %157 = arith.addf %156, %101 : vector<8x8xf32>
    %cst_51 = arith.constant dense<0xFF800000> : vector<8xf32>
    %158 = vector.multi_reduction <maximumf>, %157, %cst_51 [1] : vector<8x8xf32> to vector<8xf32>
    %159 = vector.shape_cast %158 : vector<8xf32> to vector<8x1xf32>
    %160 = vector.broadcast %159 : vector<8x1xf32> to vector<8x8xf32>
    %161 = arith.subf %157, %160 : vector<8x8xf32>
    %162 = math.exp %161 : vector<8x8xf32>
    %cst_52 = arith.constant dense<0.000000e+00> : vector<8xf32>
    %163 = vector.multi_reduction <add>, %162, %cst_52 [1] : vector<8x8xf32> to vector<8xf32>
    %164 = vector.shape_cast %163 : vector<8xf32> to vector<8x1xf32>
    %165 = tpu.reciprocal %164 {approx = true} : vector<8x1xf32> -> vector<8x1xf32>
    %166 = vector.broadcast %165 : vector<8x1xf32> to vector<8x8xf32>
    %167 = arith.mulf %162, %166 : vector<8x8xf32>
    %168 = arith.truncf %167 : vector<8x8xf32> to vector<8x8xbf16>
    %cst_53 = arith.constant dense<0.000000e+00> : vector<8x8xf32>
    %169 = tpu.matmul %168, %155, %cst_53 {dimension_numbers = #tpu.dot_dimension_numbers<[1], [0], [0], [1], [0, 0, 1, 1], [], []>} : vector<8x8xbf16>, vector<8x8xbf16>, vector<8x8xf32> -> vector<8x8xf32>
    %170 = tpu.concatenate %47, %64, %81, %98, %118, %135, %152, %169 in 1 : vector<8x8xf32>, vector<8x8xf32>, vector<8x8xf32>, vector<8x8xf32>, vector<8x8xf32>, vector<8x8xf32>, vector<8x8xf32>, vector<8x8xf32> -> vector<8x64xf32>
    %171 = arith.truncf %170 : vector<8x64xf32> to vector<8x64xbf16>
    %c0_54 = arith.constant 0 : index
    %c0_55 = arith.constant 0 : index
    %172 = vector.load %arg10[%c0_54, %c0_55] : memref<64x64xbf16, #tpu.memory_space<vmem>>, vector<64x64xbf16>
    %cst_56 = arith.constant dense<0.000000e+00> : vector<8x64xf32>
    %173 = tpu.matmul %171, %172, %cst_56 {dimension_numbers = #tpu.dot_dimension_numbers<[1], [0], [0], [1], [0, 0, 1, 1], [], []>} : vector<8x64xbf16>, vector<64x64xbf16>, vector<8x64xf32> -> vector<8x64xf32>
    %c0_57 = arith.constant 0 : index
    %c0_58 = arith.constant 0 : index
    %174 = vector.load %arg11[%c0_57, %c0_58] : memref<1x64xf32, #tpu.memory_space<vmem>>, vector<1x64xf32>
    %175 = vector.broadcast %174 : vector<1x64xf32> to vector<8x64xf32>
    %176 = arith.addf %173, %175 : vector<8x64xf32>
    %177 = arith.truncf %176 : vector<8x64xf32> to vector<8x64xbf16>
    %c0_59 = arith.constant 0 : index
    %c0_60 = arith.constant 0 : index
    %178 = vector.load %arg12[%c0_59, %c0_60] : memref<64x32xbf16, #tpu.memory_space<vmem>>, vector<64x32xbf16>
    %cst_61 = arith.constant dense<0.000000e+00> : vector<8x32xf32>
    %179 = tpu.matmul %177, %178, %cst_61 {dimension_numbers = #tpu.dot_dimension_numbers<[1], [0], [0], [1], [0, 0, 1, 1], [], []>} : vector<8x64xbf16>, vector<64x32xbf16>, vector<8x32xf32> -> vector<8x32xf32>
    %c0_62 = arith.constant 0 : index
    %c0_63 = arith.constant 0 : index
    %180 = vector.load %arg13[%c0_62, %c0_63] : memref<1x32xf32, #tpu.memory_space<vmem>>, vector<1x32xf32>
    %181 = vector.broadcast %180 : vector<1x32xf32> to vector<8x32xf32>
    %182 = arith.addf %179, %181 : vector<8x32xf32>
    %cst_64 = arith.constant dense<0xFF800000> : vector<32xf32>
    %183 = vector.multi_reduction <maximumf>, %182, %cst_64 [0] : vector<8x32xf32> to vector<32xf32>
    %184 = vector.shape_cast %183 : vector<32xf32> to vector<1x32xf32>
    %185 = vector.broadcast %184 : vector<1x32xf32> to vector<8x32xf32>
    %186 = arith.subf %182, %185 : vector<8x32xf32>
    %187 = math.exp %186 : vector<8x32xf32>
    %cst_65 = arith.constant dense<0.000000e+00> : vector<32xf32>
    %188 = vector.multi_reduction <add>, %187, %cst_65 [0] : vector<8x32xf32> to vector<32xf32>
    %189 = vector.shape_cast %188 : vector<32xf32> to vector<1x32xf32>
    %190 = tpu.reciprocal %189 {approx = true} : vector<1x32xf32> -> vector<1x32xf32>
    %191 = vector.broadcast %190 : vector<1x32xf32> to vector<8x32xf32>
    %192 = arith.mulf %187, %191 : vector<8x32xf32>
    %c0_66 = arith.constant 0 : index
    %c0_67 = arith.constant 0 : index
    %193 = vector.load %arg14[%c0_66, %c0_67] : memref<8x32xf32, #tpu.memory_space<vmem>>, vector<8x32xf32>
    tpu.vector_store %arg14[%c0_66, %c0_67], %192 {strides = array<i32>} : memref<8x32xf32, #tpu.memory_space<vmem>>, vector<8x32xf32>,
    return
  }
  func.func @transform_0(%arg0: i32) -> (i32, i32) {
    %c0_i32 = arith.constant 0 : i32
    %c0_i32_0 = arith.constant 0 : i32
    %c0_i32_1 = arith.constant 0 : i32
    return %c0_i32, %c0_i32_0 : i32, i32
  }
  func.func @transform_1(%arg0: i32) -> (i32, i32) {
    %c0_i32 = arith.constant 0 : i32
    %c0_i32_0 = arith.constant 0 : i32
    %c0_i32_1 = arith.constant 0 : i32
    return %c0_i32, %c0_i32_0 : i32, i32
  }
  func.func @transform_2(%arg0: i32) -> (i32, i32) {
    %c0_i32 = arith.constant 0 : i32
    %c0_i32_0 = arith.constant 0 : i32
    %c0_i32_1 = arith.constant 0 : i32
    return %c0_i32, %c0_i32_0 : i32, i32
  }
  func.func @transform_3(%arg0: i32) -> (i32, i32) {
    %c0_i32 = arith.constant 0 : i32
    %c0_i32_0 = arith.constant 0 : i32
    %c0_i32_1 = arith.constant 0 : i32
    return %c0_i32, %c0_i32_0 : i32, i32
  }
  func.func @transform_4(%arg0: i32) -> (i32, i32) {
    %c0_i32 = arith.constant 0 : i32
    %c0_i32_0 = arith.constant 0 : i32
    %c0_i32_1 = arith.constant 0 : i32
    return %c0_i32, %c0_i32_0 : i32, i32
  }
  func.func @transform_5(%arg0: i32) -> (i32, i32) {
    %c0_i32 = arith.constant 0 : i32
    %c0_i32_0 = arith.constant 0 : i32
    %c0_i32_1 = arith.constant 0 : i32
    return %c0_i32, %c0_i32_0 : i32, i32
  }
  func.func @transform_6(%arg0: i32) -> (i32, i32) {
    %c0_i32 = arith.constant 0 : i32
    %c0_i32_0 = arith.constant 0 : i32
    %c0_i32_1 = arith.constant 0 : i32
    return %c0_i32, %c0_i32_0 : i32, i32
  }
  func.func @transform_7(%arg0: i32) -> (i32, i32) {
    %c0_i32 = arith.constant 0 : i32
    %c0_i32_0 = arith.constant 0 : i32
    %c0_i32_1 = arith.constant 0 : i32
    return %c0_i32, %c0_i32_0 : i32, i32
  }
  func.func @transform_8(%arg0: i32) -> (i32, i32) {
    %c0_i32 = arith.constant 0 : i32
    %c0_i32_0 = arith.constant 0 : i32
    %c0_i32_1 = arith.constant 0 : i32
    return %c0_i32, %c0_i32_0 : i32, i32
  }
  func.func @transform_9(%arg0: i32) -> (i32, i32) {
    %c0_i32 = arith.constant 0 : i32
    %c0_i32_0 = arith.constant 0 : i32
    %c0_i32_1 = arith.constant 0 : i32
    return %c0_i32, %c0_i32_0 : i32, i32
  }
  func.func @transform_10(%arg0: i32) -> (i32, i32) {
    %c0_i32 = arith.constant 0 : i32
    %c0_i32_0 = arith.constant 0 : i32
    %c0_i32_1 = arith.constant 0 : i32
    return %c0_i32, %c0_i32_0 : i32, i32
  }
  func.func @transform_11(%arg0: i32) -> (i32, i32) {
    %c0_i32 = arith.constant 0 : i32
    %c0_i32_0 = arith.constant 0 : i32
    %c0_i32_1 = arith.constant 0 : i32
    return %c0_i32, %c0_i32_0 : i32, i32
  }
  func.func @transform_12(%arg0: i32) -> (i32, i32) {
    %c0_i32 = arith.constant 0 : i32
    %c0_i32_0 = arith.constant 0 : i32
    %c0_i32_1 = arith.constant 0 : i32
    return %c0_i32, %c0_i32_0 : i32, i32
  }
  func.func @transform_13(%arg0: i32) -> (i32, i32) {
    %c0_i32 = arith.constant 0 : i32
    %c0_i32_0 = arith.constant 0 : i32
    %c0_i32_1 = arith.constant 0 : i32
    return %c0_i32, %c0_i32_0 : i32, i32
  }
}

</mosaic_0001>

<llo_original>
// kernel: tpu_custom_call.1
$region0: #{tpu_custom_call.1}
  #allocation0 [shape = 'u32[]', space=smem, size = 0x4, offset = 0x4, fixed_abs, tag = 'smem constant byte address 0x4 - core index']
  #allocation1 [shape = 'u32[144,128]{1,0:T(1,128)}', space=vmem, size = 0x12000, scoped, tag = 'internal scratch']
  %s0 = inlined_call_operand.hbm [shape: f32[8,64], index: 0, kind: input, shape index: {}]
  %s1 = inlined_call_operand.hbm [shape: f32[8,64], index: 1, kind: input, shape index: {}]
  %s2 = inlined_call_operand.vmem [shape: f32[2,8], index: 2, kind: input, shape index: {}]
  %s3 = inlined_call_operand.vmem [shape: bf16[64,64], index: 3, kind: input, shape index: {}]
  %s4 = inlined_call_operand.hbm [shape: bf16[64,64], index: 4, kind: input, shape index: {}]
  %s5 = inlined_call_operand.vmem [shape: bf16[64,64], index: 5, kind: input, shape index: {}]
  %s6 = inlined_call_operand.hbm [shape: f32[1,64], index: 6, kind: input, shape index: {}]
  %s7 = inlined_call_operand.hbm [shape: f32[1,64], index: 7, kind: input, shape index: {}]
  %s8 = inlined_call_operand.hbm [shape: f32[1,64], index: 8, kind: input, shape index: {}]
  %s9 = inlined_call_operand.hbm [shape: bf16[64,64], index: 9, kind: input, shape index: {}]
  %s10 = inlined_call_operand.vmem [shape: f32[1,64], index: 10, kind: input, shape index: {}]
  %s11 = inlined_call_operand.vmem [shape: bf16[64,32], index: 11, kind: input, shape index: {}]
  %s12 = inlined_call_operand.vmem [shape: f32[1,32], index: 12, kind: input, shape index: {}]
  %s13 = inlined_call_operand.hbm [shape: f32[8,32], index: 13, kind: output, shape index: {}]
  %s14 = sld [smem:[#allocation0]]
  $region90: #{tpu_custom_call.1} parent=0
    _
  %s16 = ssub.s32 1, %s14
  %s17 = scalar_select 0, %s16, %s14
  $region1: #{tpu_custom_call.1} parent=0
    #allocation2 [shape = 'u8[4096]{0}', space=vmem, size = 0x1000, scoped, tag = 'input window, operand 0, single buffered']
    #allocation3 [shape = 's32[1]{0}', space=sflag, size = 0x4, scoped, tag = 'scoped memory for tpu_custom_call.1']
    #allocation4 [shape = 's32[1]{0}', space=sflag, size = 0x4, scoped, tag = 'scoped memory for tpu_custom_call.1']
    #allocation5 [shape = 'u8[4096]{0}', space=vmem, size = 0x1000, scoped, tag = 'input window, operand 1, single buffered']
    #allocation6 [shape = 's32[1]{0}', space=sflag, size = 0x4, scoped, tag = 'scoped memory for tpu_custom_call.1']
    #allocation7 [shape = 'u8[16384]{0}', space=vmem, size = 0x4000, scoped, tag = 'input window, operand 4, single buffered']
    #allocation8 [shape = 'u8[512]{0}', space=vmem, size = 0x400, scoped, tag = 'input window, operand 6, single buffered']
    #allocation9 [shape = 's32[1]{0}', space=sflag, size = 0x4, scoped, tag = 'scoped memory for tpu_custom_call.1']
    #allocation10 [shape = 'u8[512]{0}', space=vmem, size = 0x400, scoped, tag = 'input window, operand 7, single buffered']
    #allocation11 [shape = 'u8[512]{0}', space=vmem, size = 0x400, scoped, tag = 'input window, operand 8, single buffered']
    #allocation12 [shape = 's32[1]{0}', space=sflag, size = 0x4, scoped, tag = 'scoped memory for tpu_custom_call.1']
    #allocation13 [shape = 'u8[16384]{0}', space=vmem, size = 0x4000, scoped, tag = 'input window, operand 9, single buffered']
    #allocation14 [shape = 'u8[4096]{0}', space=vmem, size = 0x1000, scoped, tag = 'output window, operand 0, single buffered']
    %18 = vsyncpa [#allocation3], 0
    %19 = vsyncpa [#allocation6], 0
    %20 = vsyncpa [#allocation9], 0
    %21 = vsyncpa [#allocation12], 0
    %22 = vsyncpa [#allocation4], 0
    // Predicated region
    $region2: #{tpu_custom_call.1} parent=1 // pred_check
      _
    $region3: #{tpu_custom_call.1} parent=1 // pred_check_branch
      %24 = sbr.rel (0) target = $region5
    $region4: #{tpu_custom_call.1} parent=1 // pred_region
      %s26 = ssub.s32 128, 128
      %27 = vsyncadd [#allocation3], %s26
      %s29 = sshll.u32 [#allocation2], 4
      %s30 = int_to_ptr.vmem [resolvable:$true] %s29
      %32 = dma.hbm_to_vmem [thread:$0]  %s0, 128, %s30, [#allocation3]
    $region5: #{tpu_custom_call.1} parent=1 // pred_fallthru
      _
    // Predicated region
    $region6: #{tpu_custom_call.1} parent=1 // pred_check
      _
    $region7: #{tpu_custom_call.1} parent=1 // pred_check_branch
      %34 = sbr.rel (0) target = $region9
    $region8: #{tpu_custom_call.1} parent=1 // pred_region
      %s36 = ssub.s32 128, 128
      %37 = vsyncadd [#allocation6], %s36
      %s39 = sshll.u32 [#allocation5], 4
      %s40 = int_to_ptr.vmem [resolvable:$true] %s39
      %42 = dma.hbm_to_vmem [thread:$0]  %s1, 128, %s40, [#allocation6]
    $region9: #{tpu_custom_call.1} parent=1 // pred_fallthru
      _
    // Predicated region
    $region10: #{tpu_custom_call.1} parent=1 // pred_check
      _
    $region11: #{tpu_custom_call.1} parent=1 // pred_check_branch
      %44 = sbr.rel (0) target = $region13
    $region12: #{tpu_custom_call.1} parent=1 // pred_region
      _
    $region13: #{tpu_custom_call.1} parent=1 // pred_fallthru
      _
    // Predicated region
    $region14: #{tpu_custom_call.1} parent=1 // pred_check
      _
    $region15: #{tpu_custom_call.1} parent=1 // pred_check_branch
      %46 = sbr.rel (0) target = $region17
    $region16: #{tpu_custom_call.1} parent=1 // pred_region
      _
    $region17: #{tpu_custom_call.1} parent=1 // pred_fallthru
      _
    // Predicated region
    $region18: #{tpu_custom_call.1} parent=1 // pred_check
      _
    $region19: #{tpu_custom_call.1} parent=1 // pred_check_branch
      %48 = sbr.rel (0) target = $region21
    $region20: #{tpu_custom_call.1} parent=1 // pred_region
      %s50 = ssub.s32 512, 512
      %51 = vsyncadd [#allocation6], %s50
      %s52 = sshll.u32 [#allocation7], 4
      %s53 = int_to_ptr.vmem [resolvable:$true] %s52
      %58 = dma.hbm_to_vmem [thread:$0]  %s4, 512, %s53, [#allocation6], 64, 64, 4
    $region21: #{tpu_custom_call.1} parent=1 // pred_fallthru
      _
    // Predicated region
    $region22: #{tpu_custom_call.1} parent=1 // pred_check
      _
    $region23: #{tpu_custom_call.1} parent=1 // pred_check_branch
      %60 = sbr.rel (0) target = $region25
    $region24: #{tpu_custom_call.1} parent=1 // pred_region
      _
    $region25: #{tpu_custom_call.1} parent=1 // pred_fallthru
      _
    // Predicated region
    $region26: #{tpu_custom_call.1} parent=1 // pred_check
      _
    $region27: #{tpu_custom_call.1} parent=1 // pred_check_branch
      %62 = sbr.rel (0) target = $region29
    $region28: #{tpu_custom_call.1} parent=1 // pred_region
      %s64 = ssub.s32 16, 16
      %65 = vsyncadd [#allocation9], %s64
      %s67 = sshll.u32 [#allocation8], 4
      %s68 = int_to_ptr.vmem [resolvable:$true] %s67
      %70 = dma.hbm_to_vmem [thread:$0]  %s6, 16, %s68, [#allocation9]
    $region29: #{tpu_custom_call.1} parent=1 // pred_fallthru
      _
    // Predicated region
    $region30: #{tpu_custom_call.1} parent=1 // pred_check
      _
    $region31: #{tpu_custom_call.1} parent=1 // pred_check_branch
      %72 = sbr.rel (0) target = $region33
    $region32: #{tpu_custom_call.1} parent=1 // pred_region
      %s74 = ssub.s32 16, 16
      %75 = vsyncadd [#allocation9], %s74
      %s77 = sshll.u32 [#allocation10], 4
      %s78 = int_to_ptr.vmem [resolvable:$true] %s77
      %80 = dma.hbm_to_vmem [thread:$0]  %s7, 16, %s78, [#allocation9]
    $region33: #{tpu_custom_call.1} parent=1 // pred_fallthru
      _
    // Predicated region
    $region34: #{tpu_custom_call.1} parent=1 // pred_check
      _
    $region35: #{tpu_custom_call.1} parent=1 // pred_check_branch
      %82 = sbr.rel (0) target = $region37
    $region36: #{tpu_custom_call.1} parent=1 // pred_region
      %s84 = ssub.s32 16, 16
      %85 = vsyncadd [#allocation12], %s84
      %s87 = sshll.u32 [#allocation11], 4
      %s88 = int_to_ptr.vmem [resolvable:$true] %s87
      %90 = dma.hbm_to_vmem [thread:$0]  %s8, 16, %s88, [#allocation12]
    $region37: #{tpu_custom_call.1} parent=1 // pred_fallthru
      _
    // Predicated region
    $region38: #{tpu_custom_call.1} parent=1 // pred_check
      _
    $region39: #{tpu_custom_call.1} parent=1 // pred_check_branch
      %92 = sbr.rel (0) target = $region41
    $region40: #{tpu_custom_call.1} parent=1 // pred_region
      %s94 = ssub.s32 512, 512
      %95 = vsyncadd [#allocation12], %s94
      %s96 = sshll.u32 [#allocation13], 4
      %s97 = int_to_ptr.vmem [resolvable:$true] %s96
      %102 = dma.hbm_to_vmem [thread:$0]  %s9, 512, %s97, [#allocation12], 64, 64, 4
    $region41: #{tpu_custom_call.1} parent=1 // pred_fallthru
      _
    // Predicated region
    $region42: #{tpu_custom_call.1} parent=1 // pred_check
      _
    $region43: #{tpu_custom_call.1} parent=1 // pred_check_branch
      %104 = sbr.rel (0) target = $region45
    $region44: #{tpu_custom_call.1} parent=1 // pred_region
      _
    $region45: #{tpu_custom_call.1} parent=1 // pred_fallthru
      _
    // Predicated region
    $region46: #{tpu_custom_call.1} parent=1 // pred_check
      _
    $region47: #{tpu_custom_call.1} parent=1 // pred_check_branch
      %106 = sbr.rel (0) target = $region49
    $region48: #{tpu_custom_call.1} parent=1 // pred_region
      _
    $region49: #{tpu_custom_call.1} parent=1 // pred_fallthru
      _
    // Predicated region
    $region50: #{tpu_custom_call.1} parent=1 // pred_check
      _
    $region51: #{tpu_custom_call.1} parent=1 // pred_check_branch
      %108 = sbr.rel (0) target = $region53
    $region52: #{tpu_custom_call.1} parent=1 // pred_region
      _
    $region53: #{tpu_custom_call.1} parent=1 // pred_fallthru
      _
    // Predicated region
    $region54: #{tpu_custom_call.1} parent=1 // pred_check
      _
    $region55: #{tpu_custom_call.1} parent=1 // pred_check_branch
      %110 = sbr.rel (0) target = $region57
    $region56: #{tpu_custom_call.1} parent=1 // pred_region
      %111 = dma.done [#allocation3], 128
    $region57: #{tpu_custom_call.1} parent=1 // pred_fallthru
      _
    // Predicated region
    $region58: #{tpu_custom_call.1} parent=1 // pred_check
      _
    $region59: #{tpu_custom_call.1} parent=1 // pred_check_branch
      %113 = sbr.rel (0) target = $region61
    $region60: #{tpu_custom_call.1} parent=1 // pred_region
      %114 = dma.done [#allocation6], 128
    $region61: #{tpu_custom_call.1} parent=1 // pred_fallthru
      _
    // Predicated region
    $region62: #{tpu_custom_call.1} parent=1 // pred_check
      _
    $region63: #{tpu_custom_call.1} parent=1 // pred_check_branch
      %116 = sbr.rel (0) target = $region65
    $region64: #{tpu_custom_call.1} parent=1 // pred_region
      %117 = dma.done [#allocation6], 512
    $region65: #{tpu_custom_call.1} parent=1 // pred_fallthru
      _
    // Predicated region
    $region66: #{tpu_custom_call.1} parent=1 // pred_check
      _
    $region67: #{tpu_custom_call.1} parent=1 // pred_check_branch
      %119 = sbr.rel (0) target = $region69
    $region68: #{tpu_custom_call.1} parent=1 // pred_region
      %120 = dma.done [#allocation9], 16
    $region69: #{tpu_custom_call.1} parent=1 // pred_fallthru
      _
    // Predicated region
    $region70: #{tpu_custom_call.1} parent=1 // pred_check
      _
    $region71: #{tpu_custom_call.1} parent=1 // pred_check_branch
      %122 = sbr.rel (0) target = $region73
    $region72: #{tpu_custom_call.1} parent=1 // pred_region
      %123 = dma.done [#allocation9], 16
    $region73: #{tpu_custom_call.1} parent=1 // pred_fallthru
      _
    // Predicated region
    $region74: #{tpu_custom_call.1} parent=1 // pred_check
      _
    $region75: #{tpu_custom_call.1} parent=1 // pred_check_branch
      %125 = sbr.rel (0) target = $region77
    $region76: #{tpu_custom_call.1} parent=1 // pred_region
      %126 = dma.done [#allocation12], 16
    $region77: #{tpu_custom_call.1} parent=1 // pred_fallthru
      _
    // Predicated region
    $region78: #{tpu_custom_call.1} parent=1 // pred_check
      _
    $region79: #{tpu_custom_call.1} parent=1 // pred_check_branch
      %128 = sbr.rel (0) target = $region81
    $region80: #{tpu_custom_call.1} parent=1 // pred_region
      %129 = dma.done [#allocation12], 512
    $region81: #{tpu_custom_call.1} parent=1 // pred_fallthru
      _
    %v131 = vld [vmem:[%s2] sm:$0x3]
    %vm132 = vcmp.gt.f32.partialorder %v131, 0.5
    %v133 = vsel %vm132, -1e+30, 0.0
    %v134 = vld [vmem:[#allocation2] sm:$0xff]
    %v135 = vpack.c.bf16 %v134, %v134
    %v136 = vld [vmem:[#allocation5] sm:$0xff]
    %v137 = vpack.c.bf16 %v136, %v136
    %v138 = vld [vmem:[%s3] sm:$0xf]
    %v139 = vld [vmem:[%s3 + $0x4] sm:$0xf]
    %v140 = vld [vmem:[%s3 + $0x8] sm:$0xf]
    %v141 = vld [vmem:[%s3 + $0xc] sm:$0xf]
    %v142 = vld [vmem:[%s3 + $0x10] sm:$0xf]
    %v143 = vld [vmem:[%s3 + $0x14] sm:$0xf]
    %v144 = vld [vmem:[%s3 + $0x18] sm:$0xf]
    %v145 = vld [vmem:[%s3 + $0x1c] sm:$0xf]
    %v146 = vld [vmem:[#allocation8] sm:$0x1]
    %v148 = vlaneseq
    %v149 = vshrl.u32 %v148, 7
    %v150 = vsub.s32 0, %v149
    %v151 = vrot.slane %v146, %v150
    %v161 = vunpack.c.l.b16 %v138
    %v162 = vunpack.c.l.b16 %v139
    %v163 = vunpack.c.l.b16 %v140
    %v164 = vunpack.c.l.b16 %v141
    %v165 = vunpack.c.l.b16 %v142
    %v166 = vunpack.c.l.b16 %v143
    %v167 = vunpack.c.l.b16 %v144
    %v168 = vunpack.c.l.b16 %v145
    %v169 = vpack.c.b16 %v162, %v161
    %v170 = vpack.c.b16 %v164, %v163
    %v171 = vpack.c.b16 %v166, %v165
    %v172 = vpack.c.b16 %v168, %v167
    %vm177 = vcmask 523264
    %v179 = vsel %vm177, %v135, 0
    %181 = vmatprep.subr.bf16.mxu0 0
    %182 = vmatpush1.bf16.msra.mxu0 %v169
    %183 = vmatprep.subr.bf16.mxu0 0
    %184 = vmatpush1.bf16.msra.mxu0 %v170
    %185 = vmatprep.subr.bf16.mxu0 0
    %186 = vmatpush1.bf16.msra.mxu0 %v171
    %187 = vmatprep.subr.bf16.mxu0 0
    %188 = vmatpush1.bf16.msra.mxu0 %v172
    %189 = vmatprep.subr.bf16.mxu0 0
    %190 = vmatpush1.bf16.msra.mxu0 0
    %191 = vmatprep.subr.bf16.mxu0 0
    %192 = vmatpush1.bf16.msra.mxu0 0
    %193 = vmatprep.subr.bf16.mxu0 0
    %194 = vmatpush1.bf16.msra.mxu0 0
    %195 = vmatprep.subr.bf16.mxu0 0
    %196 = vmatpush1.bf16.msra.mxu0 0
    %197 = vmatprep.subr.bf16.mxu0 0
    %198 = vmatpush1.bf16.msra.mxu0 0
    %199 = vmatprep.subr.bf16.mxu0 0
    %200 = vmatpush1.bf16.msra.mxu0 0
    %201 = vmatprep.subr.bf16.mxu0 0
    %202 = vmatpush1.bf16.msra.mxu0 0
    %203 = vmatprep.subr.bf16.mxu0 0
    %204 = vmatpush1.bf16.msra.mxu0 0
    %205 = vmatprep.subr.bf16.mxu0 0
    %206 = vmatpush1.bf16.msra.mxu0 0
    %207 = vmatprep.subr.bf16.mxu0 0
    %208 = vmatpush1.bf16.msra.mxu0 0
    %209 = vmatprep.subr.bf16.mxu0 0
    %210 = vmatpush1.bf16.msra.mxu0 0
    %211 = vmatprep.subr.bf16.mxu0 0
    %212 = vmatpush1.bf16.msra.mxu0 0
    %213 = vmatprep.mubr.bf16.mxu0 0
    %214 = vmatmul.mubr.bf16.gmra.mrb[0].mxu0 %v179
    %v215 = vpop.f32.mrb[0].mxu0
    %v216 = vadd.f32 %v151, %v215
    %v217 = vpop.f32.mrb[0].mxu0
    %v218 = vpop.f32.mrb[0].mxu0
    %v219 = vpop.f32.mrb[0].mxu0
    %220 = vdwg.mxu0
    %v221 = vld [vmem:[#allocation7] sm:$0xf]
    %v222 = vld [vmem:[#allocation7 + $0x4] sm:$0xf]
    %v223 = vld [vmem:[#allocation7 + $0x8] sm:$0xf]
    %v224 = vld [vmem:[#allocation7 + $0xc] sm:$0xf]
    %v225 = vld [vmem:[#allocation7 + $0x10] sm:$0xf]
    %v226 = vld [vmem:[#allocation7 + $0x14] sm:$0xf]
    %v227 = vld [vmem:[#allocation7 + $0x18] sm:$0xf]
    %v228 = vld [vmem:[#allocation7 + $0x1c] sm:$0xf]
    %v229 = vld [vmem:[#allocation10] sm:$0x1]
    %v231 = vlaneseq
    %v232 = vshrl.u32 %v231, 7
    %v233 = vsub.s32 0, %v232
    %v234 = vrot.slane %v229, %v233
    %v244 = vunpack.c.l.b16 %v221
    %v245 = vunpack.c.l.b16 %v222
    %v246 = vunpack.c.l.b16 %v223
    %v247 = vunpack.c.l.b16 %v224
    %v248 = vunpack.c.l.b16 %v225
    %v249 = vunpack.c.l.b16 %v226
    %v250 = vunpack.c.l.b16 %v227
    %v251 = vunpack.c.l.b16 %v228
    %v252 = vpack.c.b16 %v245, %v244
    %v253 = vpack.c.b16 %v247, %v246
    %v254 = vpack.c.b16 %v249, %v248
    %v255 = vpack.c.b16 %v251, %v250
    %v261 = vsel %vm177, %v137, 0
    %263 = vmatprep.subr.bf16.mxu0 0
    %264 = vmatpush1.bf16.msra.mxu0 %v252
    %265 = vmatprep.subr.bf16.mxu0 0
    %266 = vmatpush1.bf16.msra.mxu0 %v253
    %267 = vmatprep.subr.bf16.mxu0 0
    %268 = vmatpush1.bf16.msra.mxu0 %v254
    %269 = vmatprep.subr.bf16.mxu0 0
    %270 = vmatpush1.bf16.msra.mxu0 %v255
    %271 = vmatprep.subr.bf16.mxu0 0
    %272 = vmatpush1.bf16.msra.mxu0 0
    %273 = vmatprep.subr.bf16.mxu0 0
    %274 = vmatpush1.bf16.msra.mxu0 0
    %275 = vmatprep.subr.bf16.mxu0 0
    %276 = vmatpush1.bf16.msra.mxu0 0
    %277 = vmatprep.subr.bf16.mxu0 0
    %278 = vmatpush1.bf16.msra.mxu0 0
    %279 = vmatprep.subr.bf16.mxu0 0
    %280 = vmatpush1.bf16.msra.mxu0 0
    %281 = vmatprep.subr.bf16.mxu0 0
    %282 = vmatpush1.bf16.msra.mxu0 0
    %283 = vmatprep.subr.bf16.mxu0 0
    %284 = vmatpush1.bf16.msra.mxu0 0
    %285 = vmatprep.subr.bf16.mxu0 0
    %286 = vmatpush1.bf16.msra.mxu0 0
    %287 = vmatprep.subr.bf16.mxu0 0
    %288 = vmatpush1.bf16.msra.mxu0 0
    %289 = vmatprep.subr.bf16.mxu0 0
    %290 = vmatpush1.bf16.msra.mxu0 0
    %291 = vmatprep.subr.bf16.mxu0 0
    %292 = vmatpush1.bf16.msra.mxu0 0
    %293 = vmatprep.subr.bf16.mxu0 0
    %294 = vmatpush1.bf16.msra.mxu0 0
    %295 = vmatprep.mubr.bf16.mxu0 0
    %296 = vmatmul.mubr.bf16.gmra.mrb[0].mxu0 %v261
    %v297 = vpop.f32.mrb[0].mxu0
    %v298 = vadd.f32 %v234, %v297
    %v299 = vpop.f32.mrb[0].mxu0
    %v300 = vpop.f32.mrb[0].mxu0
    %v301 = vpop.f32.mrb[0].mxu0
    %302 = vdwg.mxu0
    %v303 = vld [vmem:[%s5] sm:$0xf]
    %v304 = vld [vmem:[%s5 + $0x4] sm:$0xf]
    %v305 = vld [vmem:[%s5 + $0x8] sm:$0xf]
    %v306 = vld [vmem:[%s5 + $0xc] sm:$0xf]
    %v307 = vld [vmem:[%s5 + $0x10] sm:$0xf]
    %v308 = vld [vmem:[%s5 + $0x14] sm:$0xf]
    %v309 = vld [vmem:[%s5 + $0x18] sm:$0xf]
    %v310 = vld [vmem:[%s5 + $0x1c] sm:$0xf]
    %v311 = vld [vmem:[#allocation11] sm:$0x1]
    %v313 = vlaneseq
    %v314 = vshrl.u32 %v313, 7
    %v315 = vsub.s32 0, %v314
    %v316 = vrot.slane %v311, %v315
    %v326 = vunpack.c.l.b16 %v303
    %v327 = vunpack.c.l.b16 %v304
    %v328 = vunpack.c.l.b16 %v305
    %v329 = vunpack.c.l.b16 %v306
    %v330 = vunpack.c.l.b16 %v307
    %v331 = vunpack.c.l.b16 %v308
    %v332 = vunpack.c.l.b16 %v309
    %v333 = vunpack.c.l.b16 %v310
    %v334 = vpack.c.b16 %v327, %v326
    %v335 = vpack.c.b16 %v329, %v328
    %v336 = vpack.c.b16 %v331, %v330
    %v337 = vpack.c.b16 %v333, %v332
    %342 = vmatprep.subr.bf16.mxu0 0
    %343 = vmatpush1.bf16.msra.mxu0 %v334
    %344 = vmatprep.subr.bf16.mxu0 0
    %345 = vmatpush1.bf16.msra.mxu0 %v335
    %346 = vmatprep.subr.bf16.mxu0 0
    %347 = vmatpush1.bf16.msra.mxu0 %v336
    %348 = vmatprep.subr.bf16.mxu0 0
    %349 = vmatpush1.bf16.msra.mxu0 %v337
    %350 = vmatprep.subr.bf16.mxu0 0
    %351 = vmatpush1.bf16.msra.mxu0 0
    %352 = vmatprep.subr.bf16.mxu0 0
    %353 = vmatpush1.bf16.msra.mxu0 0
    %354 = vmatprep.subr.bf16.mxu0 0
    %355 = vmatpush1.bf16.msra.mxu0 0
    %356 = vmatprep.subr.bf16.mxu0 0
    %357 = vmatpush1.bf16.msra.mxu0 0
    %358 = vmatprep.subr.bf16.mxu0 0
    %359 = vmatpush1.bf16.msra.mxu0 0
    %360 = vmatprep.subr.bf16.mxu0 0
    %361 = vmatpush1.bf16.msra.mxu0 0
    %362 = vmatprep.subr.bf16.mxu0 0
    %363 = vmatpush1.bf16.msra.mxu0 0
    %364 = vmatprep.subr.bf16.mxu0 0
    %365 = vmatpush1.bf16.msra.mxu0 0
    %366 = vmatprep.subr.bf16.mxu0 0
    %367 = vmatpush1.bf16.msra.mxu0 0
    %368 = vmatprep.subr.bf16.mxu0 0
    %369 = vmatpush1.bf16.msra.mxu0 0
    %370 = vmatprep.subr.bf16.mxu0 0
    %371 = vmatpush1.bf16.msra.mxu0 0
    %372 = vmatprep.subr.bf16.mxu0 0
    %373 = vmatpush1.bf16.msra.mxu0 0
    %374 = vmatprep.mubr.bf16.mxu0 0
    %375 = vmatmul.mubr.bf16.gmra.mrb[0].mxu0 %v261
    %v376 = vpop.f32.mrb[0].mxu0
    %v377 = vadd.f32 %v316, %v376
    %v378 = vpop.f32.mrb[0].mxu0
    %v379 = vpop.f32.mrb[0].mxu0
    %v380 = vpop.f32.mrb[0].mxu0
    %381 = vdwg.mxu0
    %v382 = vpack.c.bf16 %v216, %v216
    %v383 = vpack.c.bf16 %v298, %v298
    %v384 = vpack.c.bf16 %v377, %v377
    %v385 = vlaneseq
    %v386 = vshrl.u32 %v385, 7
    %v387 = vsub.s32 0, %v386
    %v388 = vrot.slane %v133, %v387
    %vm389 = vcmask 64512
    %v391 = vsel %vm389, %v382, 0
    %v394 = vsel %vm389, %v383, 0
    %396 = vmatprep.subr.bf16.mxu0 0
    %397 = vmatpush1.bf16.xpose.msra.mxu0 %v394
    %398 = vmatprep.subr.bf16.mxu0 0
    %399 = vmatpush1.bf16.xpose.msra.mxu0 0
    %400 = vmatprep.subr.bf16.mxu0 0
    %401 = vmatpush1.bf16.xpose.msra.mxu0 0
    %402 = vmatprep.subr.bf16.mxu0 0
    %403 = vmatpush1.bf16.xpose.msra.mxu0 0
    %404 = vmatprep.subr.bf16.mxu0 0
    %405 = vmatpush1.bf16.xpose.msra.mxu0 0
    %406 = vmatprep.subr.bf16.mxu0 0
    %407 = vmatpush1.bf16.xpose.msra.mxu0 0
    %408 = vmatprep.subr.bf16.mxu0 0
    %409 = vmatpush1.bf16.xpose.msra.mxu0 0
    %410 = vmatprep.subr.bf16.mxu0 0
    %411 = vmatpush1.bf16.xpose.msra.mxu0 0
    %412 = vmatprep.subr.bf16.mxu0 0
    %413 = vmatpush1.bf16.xpose.msra.mxu0 0
    %414 = vmatprep.subr.bf16.mxu0 0
    %415 = vmatpush1.bf16.xpose.msra.mxu0 0
    %416 = vmatprep.subr.bf16.mxu0 0
    %417 = vmatpush1.bf16.xpose.msra.mxu0 0
    %418 = vmatprep.subr.bf16.mxu0 0
    %419 = vmatpush1.bf16.xpose.msra.mxu0 0
    %420 = vmatprep.subr.bf16.mxu0 0
    %421 = vmatpush1.bf16.xpose.msra.mxu0 0
    %422 = vmatprep.subr.bf16.mxu0 0
    %423 = vmatpush1.bf16.xpose.msra.mxu0 0
    %424 = vmatprep.subr.bf16.mxu0 0
    %425 = vmatpush1.bf16.xpose.msra.mxu0 0
    %426 = vmatprep.subr.bf16.mxu0 0
    %427 = vmatpush1.bf16.xpose.msra.mxu0 0
    %428 = vmatprep.mubr.bf16.mxu0 0
    %429 = vmatmul.mubr.bf16.gmra.mrb[0].mxu0 %v391
    %v430 = vpop.f32.mrb[0].mxu0
    %v431 = vadd.f32 %v388, %v430
    %v432 = vpop.f32.mrb[0].mxu0
    %v433 = vpop.f32.mrb[0].mxu0
    %v434 = vpop.f32.mrb[0].mxu0
    %435 = vdwg.mxu0
    %v436 = vsel %vm389, %v431, -inf
    %437 = vmax.xlane.f32.xlu0 %v436
    %v438 = vpop.xlane.xlu0 %437
    %v439 = vsub.f32 %v431, %v438
    %v440 = vmul.f32 %v439, 1.442695
    %v441 = vpow.pop %v440
    %v442 = vsel %vm389, %v441, 0.0
    %443 = vadd.xlane.f32.xlu0 %v442
    %v444 = vpop.xlane.xlu0 %443
    %v445 = vrcp.pop %v444
    %v446 = vmul.f32 %v441, %v445
    %v447 = vpack.c.bf16 %v446, %v446
    %v449 = vsel %vm389, %v447, 0
    %vm451 = vcmask 1043456
    %v453 = vsel %vm451, %v384, 0
    %455 = vmatprep.subr.bf16.mxu0 0
    %456 = vmatpush1.bf16.msra.mxu0 %v453
    %457 = vmatprep.subr.bf16.mxu0 0
    %458 = vmatpush1.bf16.msra.mxu0 0
    %459 = vmatprep.subr.bf16.mxu0 0
    %460 = vmatpush1.bf16.msra.mxu0 0
    %461 = vmatprep.subr.bf16.mxu0 0
    %462 = vmatpush1.bf16.msra.mxu0 0
    %463 = vmatprep.subr.bf16.mxu0 0
    %464 = vmatpush1.bf16.msra.mxu0 0
    %465 = vmatprep.subr.bf16.mxu0 0
    %466 = vmatpush1.bf16.msra.mxu0 0
    %467 = vmatprep.subr.bf16.mxu0 0
    %468 = vmatpush1.bf16.msra.mxu0 0
    %469 = vmatprep.subr.bf16.mxu0 0
    %470 = vmatpush1.bf16.msra.mxu0 0
    %471 = vmatprep.subr.bf16.mxu0 0
    %472 = vmatpush1.bf16.msra.mxu0 0
    %473 = vmatprep.subr.bf16.mxu0 0
    %474 = vmatpush1.bf16.msra.mxu0 0
    %475 = vmatprep.subr.bf16.mxu0 0
    %476 = vmatpush1.bf16.msra.mxu0 0
    %477 = vmatprep.subr.bf16.mxu0 0
    %478 = vmatpush1.bf16.msra.mxu0 0
    %479 = vmatprep.subr.bf16.mxu0 0
    %480 = vmatpush1.bf16.msra.mxu0 0
    %481 = vmatprep.subr.bf16.mxu0 0
    %482 = vmatpush1.bf16.msra.mxu0 0
    %483 = vmatprep.subr.bf16.mxu0 0
    %484 = vmatpush1.bf16.msra.mxu0 0
    %485 = vmatprep.subr.bf16.mxu0 0
    %486 = vmatpush1.bf16.msra.mxu0 0
    %487 = vmatprep.mubr.bf16.mxu0 0
    %488 = vmatmul.mubr.bf16.gmra.mrb[0].mxu0 %v449
    %v489 = vpop.f32.mrb[0].mxu0
    %v490 = vadd.f32 0.0, %v489
    %v491 = vpop.f32.mrb[0].mxu0
    %v492 = vpop.f32.mrb[0].mxu0
    %v493 = vpop.f32.mrb[0].mxu0
    %494 = vdwg.mxu0
    %496 = vrot.lane.b32.xlu0 %v382, 120
    %v497 = vpop.permute.xlu0 %496
    %499 = vrot.lane.b32.xlu0 %v383, 120
    %v500 = vpop.permute.xlu0 %499
    %v502 = vsel %vm389, %v497, 0
    %v505 = vsel %vm389, %v500, 0
    %507 = vmatprep.subr.bf16.mxu0 0
    %508 = vmatpush1.bf16.xpose.msra.mxu0 %v505
    %509 = vmatprep.subr.bf16.mxu0 0
    %510 = vmatpush1.bf16.xpose.msra.mxu0 0
    %511 = vmatprep.subr.bf16.mxu0 0
    %512 = vmatpush1.bf16.xpose.msra.mxu0 0
    %513 = vmatprep.subr.bf16.mxu0 0
    %514 = vmatpush1.bf16.xpose.msra.mxu0 0
    %515 = vmatprep.subr.bf16.mxu0 0
    %516 = vmatpush1.bf16.xpose.msra.mxu0 0
    %517 = vmatprep.subr.bf16.mxu0 0
    %518 = vmatpush1.bf16.xpose.msra.mxu0 0
    %519 = vmatprep.subr.bf16.mxu0 0
    %520 = vmatpush1.bf16.xpose.msra.mxu0 0
    %521 = vmatprep.subr.bf16.mxu0 0
    %522 = vmatpush1.bf16.xpose.msra.mxu0 0
    %523 = vmatprep.subr.bf16.mxu0 0
    %524 = vmatpush1.bf16.xpose.msra.mxu0 0
    %525 = vmatprep.subr.bf16.mxu0 0
    %526 = vmatpush1.bf16.xpose.msra.mxu0 0
    %527 = vmatprep.subr.bf16.mxu0 0
    %528 = vmatpush1.bf16.xpose.msra.mxu0 0
    %529 = vmatprep.subr.bf16.mxu0 0
    %530 = vmatpush1.bf16.xpose.msra.mxu0 0
    %531 = vmatprep.subr.bf16.mxu0 0
    %532 = vmatpush1.bf16.xpose.msra.mxu0 0
    %533 = vmatprep.subr.bf16.mxu0 0
    %534 = vmatpush1.bf16.xpose.msra.mxu0 0
    %535 = vmatprep.subr.bf16.mxu0 0
    %536 = vmatpush1.bf16.xpose.msra.mxu0 0
    %537 = vmatprep.subr.bf16.mxu0 0
    %538 = vmatpush1.bf16.xpose.msra.mxu0 0
    %539 = vmatprep.mubr.bf16.mxu0 0
    %540 = vmatmul.mubr.bf16.gmra.mrb[0].mxu0 %v502
    %v541 = vpop.f32.mrb[0].mxu0
    %v542 = vadd.f32 %v388, %v541
    %v543 = vpop.f32.mrb[0].mxu0
    %v544 = vpop.f32.mrb[0].mxu0
    %v545 = vpop.f32.mrb[0].mxu0
    %546 = vdwg.mxu0
    %v547 = vsel %vm389, %v542, -inf
    %548 = vmax.xlane.f32.xlu0 %v547
    %v549 = vpop.xlane.xlu0 %548
    %v550 = vsub.f32 %v542, %v549
    %v551 = vmul.f32 %v550, 1.442695
    %v552 = vpow.pop %v551
    %v553 = vsel %vm389, %v552, 0.0
    %554 = vadd.xlane.f32.xlu0 %v553
    %v555 = vpop.xlane.xlu0 %554
    %v556 = vrcp.pop %v555
    %v557 = vmul.f32 %v552, %v556
    %v558 = vpack.c.bf16 %v557, %v557
    %560 = vrot.lane.b32.xlu0 %v384, 120
    %v561 = vpop.permute.xlu0 %560
    %v563 = vsel %vm389, %v558, 0
    %v566 = vsel %vm451, %v561, 0
    %568 = vmatprep.subr.bf16.mxu0 0
    %569 = vmatpush1.bf16.msra.mxu0 %v566
    %570 = vmatprep.subr.bf16.mxu0 0
    %571 = vmatpush1.bf16.msra.mxu0 0
    %572 = vmatprep.subr.bf16.mxu0 0
    %573 = vmatpush1.bf16.msra.mxu0 0
    %574 = vmatprep.subr.bf16.mxu0 0
    %575 = vmatpush1.bf16.msra.mxu0 0
    %576 = vmatprep.subr.bf16.mxu0 0
    %577 = vmatpush1.bf16.msra.mxu0 0
    %578 = vmatprep.subr.bf16.mxu0 0
    %579 = vmatpush1.bf16.msra.mxu0 0
    %580 = vmatprep.subr.bf16.mxu0 0
    %581 = vmatpush1.bf16.msra.mxu0 0
    %582 = vmatprep.subr.bf16.mxu0 0
    %583 = vmatpush1.bf16.msra.mxu0 0
    %584 = vmatprep.subr.bf16.mxu0 0
    %585 = vmatpush1.bf16.msra.mxu0 0
    %586 = vmatprep.subr.bf16.mxu0 0
    %587 = vmatpush1.bf16.msra.mxu0 0
    %588 = vmatprep.subr.bf16.mxu0 0
    %589 = vmatpush1.bf16.msra.mxu0 0
    %590 = vmatprep.subr.bf16.mxu0 0
    %591 = vmatpush1.bf16.msra.mxu0 0
    %592 = vmatprep.subr.bf16.mxu0 0
    %593 = vmatpush1.bf16.msra.mxu0 0
    %594 = vmatprep.subr.bf16.mxu0 0
    %595 = vmatpush1.bf16.msra.mxu0 0
    %596 = vmatprep.subr.bf16.mxu0 0
    %597 = vmatpush1.bf16.msra.mxu0 0
    %598 = vmatprep.subr.bf16.mxu0 0
    %599 = vmatpush1.bf16.msra.mxu0 0
    %600 = vmatprep.mubr.bf16.mxu0 0
    %601 = vmatmul.mubr.bf16.gmra.mrb[0].mxu0 %v563
    %v602 = vpop.f32.mrb[0].mxu0
    %v603 = vadd.f32 0.0, %v602
    %v604 = vpop.f32.mrb[0].mxu0
    %v605 = vpop.f32.mrb[0].mxu0
    %v606 = vpop.f32.mrb[0].mxu0
    %607 = vdwg.mxu0
    %608 = vrot.lane.b32.xlu0 %v382, 112
    %v609 = vpop.permute.xlu0 %608
    %610 = vrot.lane.b32.xlu0 %v383, 112
    %v611 = vpop.permute.xlu0 %610
    %v613 = vsel %vm389, %v609, 0
    %v616 = vsel %vm389, %v611, 0
    %618 = vmatprep.subr.bf16.mxu0 0
    %619 = vmatpush1.bf16.xpose.msra.mxu0 %v616
    %620 = vmatprep.subr.bf16.mxu0 0
    %621 = vmatpush1.bf16.xpose.msra.mxu0 0
    %622 = vmatprep.subr.bf16.mxu0 0
    %623 = vmatpush1.bf16.xpose.msra.mxu0 0
    %624 = vmatprep.subr.bf16.mxu0 0
    %625 = vmatpush1.bf16.xpose.msra.mxu0 0
    %626 = vmatprep.subr.bf16.mxu0 0
    %627 = vmatpush1.bf16.xpose.msra.mxu0 0
    %628 = vmatprep.subr.bf16.mxu0 0
    %629 = vmatpush1.bf16.xpose.msra.mxu0 0
    %630 = vmatprep.subr.bf16.mxu0 0
    %631 = vmatpush1.bf16.xpose.msra.mxu0 0
    %632 = vmatprep.subr.bf16.mxu0 0
    %633 = vmatpush1.bf16.xpose.msra.mxu0 0
    %634 = vmatprep.subr.bf16.mxu0 0
    %635 = vmatpush1.bf16.xpose.msra.mxu0 0
    %636 = vmatprep.subr.bf16.mxu0 0
    %637 = vmatpush1.bf16.xpose.msra.mxu0 0
    %638 = vmatprep.subr.bf16.mxu0 0
    %639 = vmatpush1.bf16.xpose.msra.mxu0 0
    %640 = vmatprep.subr.bf16.mxu0 0
    %641 = vmatpush1.bf16.xpose.msra.mxu0 0
    %642 = vmatprep.subr.bf16.mxu0 0
    %643 = vmatpush1.bf16.xpose.msra.mxu0 0
    %644 = vmatprep.subr.bf16.mxu0 0
    %645 = vmatpush1.bf16.xpose.msra.mxu0 0
    %646 = vmatprep.subr.bf16.mxu0 0
    %647 = vmatpush1.bf16.xpose.msra.mxu0 0
    %648 = vmatprep.subr.bf16.mxu0 0
    %649 = vmatpush1.bf16.xpose.msra.mxu0 0
    %650 = vmatprep.mubr.bf16.mxu0 0
    %651 = vmatmul.mubr.bf16.gmra.mrb[0].mxu0 %v613
    %v652 = vpop.f32.mrb[0].mxu0
    %v653 = vadd.f32 %v388, %v652
    %v654 = vpop.f32.mrb[0].mxu0
    %v655 = vpop.f32.mrb[0].mxu0
    %v656 = vpop.f32.mrb[0].mxu0
    %657 = vdwg.mxu0
    %v658 = vsel %vm389, %v653, -inf
    %659 = vmax.xlane.f32.xlu0 %v658
    %v660 = vpop.xlane.xlu0 %659
    %v661 = vsub.f32 %v653, %v660
    %v662 = vmul.f32 %v661, 1.442695
    %v663 = vpow.pop %v662
    %v664 = vsel %vm389, %v663, 0.0
    %665 = vadd.xlane.f32.xlu0 %v664
    %v666 = vpop.xlane.xlu0 %665
    %v667 = vrcp.pop %v666
    %v668 = vmul.f32 %v663, %v667
    %v669 = vpack.c.bf16 %v668, %v668
    %670 = vrot.lane.b32.xlu0 %v384, 112
    %v671 = vpop.permute.xlu0 %670
    %v673 = vsel %vm389, %v669, 0
    %v676 = vsel %vm451, %v671, 0
    %678 = vmatprep.subr.bf16.mxu0 0
    %679 = vmatpush1.bf16.msra.mxu0 %v676
    %680 = vmatprep.subr.bf16.mxu0 0
    %681 = vmatpush1.bf16.msra.mxu0 0
    %682 = vmatprep.subr.bf16.mxu0 0
    %683 = vmatpush1.bf16.msra.mxu0 0
    %684 = vmatprep.subr.bf16.mxu0 0
    %685 = vmatpush1.bf16.msra.mxu0 0
    %686 = vmatprep.subr.bf16.mxu0 0
    %687 = vmatpush1.bf16.msra.mxu0 0
    %688 = vmatprep.subr.bf16.mxu0 0
    %689 = vmatpush1.bf16.msra.mxu0 0
    %690 = vmatprep.subr.bf16.mxu0 0
    %691 = vmatpush1.bf16.msra.mxu0 0
    %692 = vmatprep.subr.bf16.mxu0 0
    %693 = vmatpush1.bf16.msra.mxu0 0
    %694 = vmatprep.subr.bf16.mxu0 0
    %695 = vmatpush1.bf16.msra.mxu0 0
    %696 = vmatprep.subr.bf16.mxu0 0
    %697 = vmatpush1.bf16.msra.mxu0 0
    %698 = vmatprep.subr.bf16.mxu0 0
    %699 = vmatpush1.bf16.msra.mxu0 0
    %700 = vmatprep.subr.bf16.mxu0 0
    %701 = vmatpush1.bf16.msra.mxu0 0
    %702 = vmatprep.subr.bf16.mxu0 0
    %703 = vmatpush1.bf16.msra.mxu0 0
    %704 = vmatprep.subr.bf16.mxu0 0
    %705 = vmatpush1.bf16.msra.mxu0 0
    %706 = vmatprep.subr.bf16.mxu0 0
    %707 = vmatpush1.bf16.msra.mxu0 0
    %708 = vmatprep.subr.bf16.mxu0 0
    %709 = vmatpush1.bf16.msra.mxu0 0
    %710 = vmatprep.mubr.bf16.mxu0 0
    %711 = vmatmul.mubr.bf16.gmra.mrb[0].mxu0 %v673
    %v712 = vpop.f32.mrb[0].mxu0
    %v713 = vadd.f32 0.0, %v712
    %v714 = vpop.f32.mrb[0].mxu0
    %v715 = vpop.f32.mrb[0].mxu0
    %v716 = vpop.f32.mrb[0].mxu0
    %717 = vdwg.mxu0
    %718 = vrot.lane.b32.xlu0 %v382, 104
    %v719 = vpop.permute.xlu0 %718
    %720 = vrot.lane.b32.xlu0 %v383, 104
    %v721 = vpop.permute.xlu0 %720
    %v723 = vsel %vm389, %v719, 0
    %v726 = vsel %vm389, %v721, 0
    %728 = vmatprep.subr.bf16.mxu0 0
    %729 = vmatpush1.bf16.xpose.msra.mxu0 %v726
    %730 = vmatprep.subr.bf16.mxu0 0
    %731 = vmatpush1.bf16.xpose.msra.mxu0 0
    %732 = vmatprep.subr.bf16.mxu0 0
    %733 = vmatpush1.bf16.xpose.msra.mxu0 0
    %734 = vmatprep.subr.bf16.mxu0 0
    %735 = vmatpush1.bf16.xpose.msra.mxu0 0
    %736 = vmatprep.subr.bf16.mxu0 0
    %737 = vmatpush1.bf16.xpose.msra.mxu0 0
    %738 = vmatprep.subr.bf16.mxu0 0
    %739 = vmatpush1.bf16.xpose.msra.mxu0 0
    %740 = vmatprep.subr.bf16.mxu0 0
    %741 = vmatpush1.bf16.xpose.msra.mxu0 0
    %742 = vmatprep.subr.bf16.mxu0 0
    %743 = vmatpush1.bf16.xpose.msra.mxu0 0
    %744 = vmatprep.subr.bf16.mxu0 0
    %745 = vmatpush1.bf16.xpose.msra.mxu0 0
    %746 = vmatprep.subr.bf16.mxu0 0
    %747 = vmatpush1.bf16.xpose.msra.mxu0 0
    %748 = vmatprep.subr.bf16.mxu0 0
    %749 = vmatpush1.bf16.xpose.msra.mxu0 0
    %750 = vmatprep.subr.bf16.mxu0 0
    %751 = vmatpush1.bf16.xpose.msra.mxu0 0
    %752 = vmatprep.subr.bf16.mxu0 0
    %753 = vmatpush1.bf16.xpose.msra.mxu0 0
    %754 = vmatprep.subr.bf16.mxu0 0
    %755 = vmatpush1.bf16.xpose.msra.mxu0 0
    %756 = vmatprep.subr.bf16.mxu0 0
    %757 = vmatpush1.bf16.xpose.msra.mxu0 0
    %758 = vmatprep.subr.bf16.mxu0 0
    %759 = vmatpush1.bf16.xpose.msra.mxu0 0
    %760 = vmatprep.mubr.bf16.mxu0 0
    %761 = vmatmul.mubr.bf16.gmra.mrb[0].mxu0 %v723
    %v762 = vpop.f32.mrb[0].mxu0
    %v763 = vadd.f32 %v388, %v762
    %v764 = vpop.f32.mrb[0].mxu0
    %v765 = vpop.f32.mrb[0].mxu0
    %v766 = vpop.f32.mrb[0].mxu0
    %767 = vdwg.mxu0
    %v768 = vsel %vm389, %v763, -inf
    %769 = vmax.xlane.f32.xlu0 %v768
    %v770 = vpop.xlane.xlu0 %769
    %v771 = vsub.f32 %v763, %v770
    %v772 = vmul.f32 %v771, 1.442695
    %v773 = vpow.pop %v772
    %v774 = vsel %vm389, %v773, 0.0
    %775 = vadd.xlane.f32.xlu0 %v774
    %v776 = vpop.xlane.xlu0 %775
    %v777 = vrcp.pop %v776
    %v778 = vmul.f32 %v773, %v777
    %v779 = vpack.c.bf16 %v778, %v778
    %780 = vrot.lane.b32.xlu0 %v384, 104
    %v781 = vpop.permute.xlu0 %780
    %v783 = vsel %vm389, %v779, 0
    %v786 = vsel %vm451, %v781, 0
    %788 = vmatprep.subr.bf16.mxu0 0
    %789 = vmatpush1.bf16.msra.mxu0 %v786
    %790 = vmatprep.subr.bf16.mxu0 0
    %791 = vmatpush1.bf16.msra.mxu0 0
    %792 = vmatprep.subr.bf16.mxu0 0
    %793 = vmatpush1.bf16.msra.mxu0 0
    %794 = vmatprep.subr.bf16.mxu0 0
    %795 = vmatpush1.bf16.msra.mxu0 0
    %796 = vmatprep.subr.bf16.mxu0 0
    %797 = vmatpush1.bf16.msra.mxu0 0
    %798 = vmatprep.subr.bf16.mxu0 0
    %799 = vmatpush1.bf16.msra.mxu0 0
    %800 = vmatprep.subr.bf16.mxu0 0
    %801 = vmatpush1.bf16.msra.mxu0 0
    %802 = vmatprep.subr.bf16.mxu0 0
    %803 = vmatpush1.bf16.msra.mxu0 0
    %804 = vmatprep.subr.bf16.mxu0 0
    %805 = vmatpush1.bf16.msra.mxu0 0
    %806 = vmatprep.subr.bf16.mxu0 0
    %807 = vmatpush1.bf16.msra.mxu0 0
    %808 = vmatprep.subr.bf16.mxu0 0
    %809 = vmatpush1.bf16.msra.mxu0 0
    %810 = vmatprep.subr.bf16.mxu0 0
    %811 = vmatpush1.bf16.msra.mxu0 0
    %812 = vmatprep.subr.bf16.mxu0 0
    %813 = vmatpush1.bf16.msra.mxu0 0
    %814 = vmatprep.subr.bf16.mxu0 0
    %815 = vmatpush1.bf16.msra.mxu0 0
    %816 = vmatprep.subr.bf16.mxu0 0
    %817 = vmatpush1.bf16.msra.mxu0 0
    %818 = vmatprep.subr.bf16.mxu0 0
    %819 = vmatpush1.bf16.msra.mxu0 0
    %820 = vmatprep.mubr.bf16.mxu0 0
    %821 = vmatmul.mubr.bf16.gmra.mrb[0].mxu0 %v783
    %v822 = vpop.f32.mrb[0].mxu0
    %v823 = vadd.f32 0.0, %v822
    %v824 = vpop.f32.mrb[0].mxu0
    %v825 = vpop.f32.mrb[0].mxu0
    %v826 = vpop.f32.mrb[0].mxu0
    %827 = vdwg.mxu0
    %v828 = vlaneseq
    %v829 = vshrl.u32 %v828, 7
    %v830 = vsub.s32 1, %v829
    %v831 = vrot.slane %v133, %v830
    %832 = vrot.lane.b32.xlu0 %v382, 96
    %v833 = vpop.permute.xlu0 %832
    %834 = vrot.lane.b32.xlu0 %v383, 96
    %v835 = vpop.permute.xlu0 %834
    %v837 = vsel %vm389, %v833, 0
    %v840 = vsel %vm389, %v835, 0
    %842 = vmatprep.subr.bf16.mxu0 0
    %843 = vmatpush1.bf16.xpose.msra.mxu0 %v840
    %844 = vmatprep.subr.bf16.mxu0 0
    %845 = vmatpush1.bf16.xpose.msra.mxu0 0
    %846 = vmatprep.subr.bf16.mxu0 0
    %847 = vmatpush1.bf16.xpose.msra.mxu0 0
    %848 = vmatprep.subr.bf16.mxu0 0
    %849 = vmatpush1.bf16.xpose.msra.mxu0 0
    %850 = vmatprep.subr.bf16.mxu0 0
    %851 = vmatpush1.bf16.xpose.msra.mxu0 0
    %852 = vmatprep.subr.bf16.mxu0 0
    %853 = vmatpush1.bf16.xpose.msra.mxu0 0
    %854 = vmatprep.subr.bf16.mxu0 0
    %855 = vmatpush1.bf16.xpose.msra.mxu0 0
    %856 = vmatprep.subr.bf16.mxu0 0
    %857 = vmatpush1.bf16.xpose.msra.mxu0 0
    %858 = vmatprep.subr.bf16.mxu0 0
    %859 = vmatpush1.bf16.xpose.msra.mxu0 0
    %860 = vmatprep.subr.bf16.mxu0 0
    %861 = vmatpush1.bf16.xpose.msra.mxu0 0
    %862 = vmatprep.subr.bf16.mxu0 0
    %863 = vmatpush1.bf16.xpose.msra.mxu0 0
    %864 = vmatprep.subr.bf16.mxu0 0
    %865 = vmatpush1.bf16.xpose.msra.mxu0 0
    %866 = vmatprep.subr.bf16.mxu0 0
    %867 = vmatpush1.bf16.xpose.msra.mxu0 0
    %868 = vmatprep.subr.bf16.mxu0 0
    %869 = vmatpush1.bf16.xpose.msra.mxu0 0
    %870 = vmatprep.subr.bf16.mxu0 0
    %871 = vmatpush1.bf16.xpose.msra.mxu0 0
    %872 = vmatprep.subr.bf16.mxu0 0
    %873 = vmatpush1.bf16.xpose.msra.mxu0 0
    %874 = vmatprep.mubr.bf16.mxu0 0
    %875 = vmatmul.mubr.bf16.gmra.mrb[0].mxu0 %v837
    %v876 = vpop.f32.mrb[0].mxu0
    %v877 = vadd.f32 %v831, %v876
    %v878 = vpop.f32.mrb[0].mxu0
    %v879 = vpop.f32.mrb[0].mxu0
    %v880 = vpop.f32.mrb[0].mxu0
    %881 = vdwg.mxu0
    %v882 = vsel %vm389, %v877, -inf
    %883 = vmax.xlane.f32.xlu0 %v882
    %v884 = vpop.xlane.xlu0 %883
    %v885 = vsub.f32 %v877, %v884
    %v886 = vmul.f32 %v885, 1.442695
    %v887 = vpow.pop %v886
    %v888 = vsel %vm389, %v887, 0.0
    %889 = vadd.xlane.f32.xlu0 %v888
    %v890 = vpop.xlane.xlu0 %889
    %v891 = vrcp.pop %v890
    %v892 = vmul.f32 %v887, %v891
    %v893 = vpack.c.bf16 %v892, %v892
    %894 = vrot.lane.b32.xlu0 %v384, 96
    %v895 = vpop.permute.xlu0 %894
    %v897 = vsel %vm389, %v893, 0
    %v900 = vsel %vm451, %v895, 0
    %902 = vmatprep.subr.bf16.mxu0 0
    %903 = vmatpush1.bf16.msra.mxu0 %v900
    %904 = vmatprep.subr.bf16.mxu0 0
    %905 = vmatpush1.bf16.msra.mxu0 0
    %906 = vmatprep.subr.bf16.mxu0 0
    %907 = vmatpush1.bf16.msra.mxu0 0
    %908 = vmatprep.subr.bf16.mxu0 0
    %909 = vmatpush1.bf16.msra.mxu0 0
    %910 = vmatprep.subr.bf16.mxu0 0
    %911 = vmatpush1.bf16.msra.mxu0 0
    %912 = vmatprep.subr.bf16.mxu0 0
    %913 = vmatpush1.bf16.msra.mxu0 0
    %914 = vmatprep.subr.bf16.mxu0 0
    %915 = vmatpush1.bf16.msra.mxu0 0
    %916 = vmatprep.subr.bf16.mxu0 0
    %917 = vmatpush1.bf16.msra.mxu0 0
    %918 = vmatprep.subr.bf16.mxu0 0
    %919 = vmatpush1.bf16.msra.mxu0 0
    %920 = vmatprep.subr.bf16.mxu0 0
    %921 = vmatpush1.bf16.msra.mxu0 0
    %922 = vmatprep.subr.bf16.mxu0 0
    %923 = vmatpush1.bf16.msra.mxu0 0
    %924 = vmatprep.subr.bf16.mxu0 0
    %925 = vmatpush1.bf16.msra.mxu0 0
    %926 = vmatprep.subr.bf16.mxu0 0
    %927 = vmatpush1.bf16.msra.mxu0 0
    %928 = vmatprep.subr.bf16.mxu0 0
    %929 = vmatpush1.bf16.msra.mxu0 0
    %930 = vmatprep.subr.bf16.mxu0 0
    %931 = vmatpush1.bf16.msra.mxu0 0
    %932 = vmatprep.subr.bf16.mxu0 0
    %933 = vmatpush1.bf16.msra.mxu0 0
    %934 = vmatprep.mubr.bf16.mxu0 0
    %935 = vmatmul.mubr.bf16.gmra.mrb[0].mxu0 %v897
    %v936 = vpop.f32.mrb[0].mxu0
    %v937 = vadd.f32 0.0, %v936
    %v938 = vpop.f32.mrb[0].mxu0
    %v939 = vpop.f32.mrb[0].mxu0
    %v940 = vpop.f32.mrb[0].mxu0
    %941 = vdwg.mxu0
    %942 = vrot.lane.b32.xlu0 %v382, 88
    %v943 = vpop.permute.xlu0 %942
    %944 = vrot.lane.b32.xlu0 %v383, 88
    %v945 = vpop.permute.xlu0 %944
    %v947 = vsel %vm389, %v943, 0
    %v950 = vsel %vm389, %v945, 0
    %952 = vmatprep.subr.bf16.mxu0 0
    %953 = vmatpush1.bf16.xpose.msra.mxu0 %v950
    %954 = vmatprep.subr.bf16.mxu0 0
    %955 = vmatpush1.bf16.xpose.msra.mxu0 0
    %956 = vmatprep.subr.bf16.mxu0 0
    %957 = vmatpush1.bf16.xpose.msra.mxu0 0
    %958 = vmatprep.subr.bf16.mxu0 0
    %959 = vmatpush1.bf16.xpose.msra.mxu0 0
    %960 = vmatprep.subr.bf16.mxu0 0
    %961 = vmatpush1.bf16.xpose.msra.mxu0 0
    %962 = vmatprep.subr.bf16.mxu0 0
    %963 = vmatpush1.bf16.xpose.msra.mxu0 0
    %964 = vmatprep.subr.bf16.mxu0 0
    %965 = vmatpush1.bf16.xpose.msra.mxu0 0
    %966 = vmatprep.subr.bf16.mxu0 0
    %967 = vmatpush1.bf16.xpose.msra.mxu0 0
    %968 = vmatprep.subr.bf16.mxu0 0
    %969 = vmatpush1.bf16.xpose.msra.mxu0 0
    %970 = vmatprep.subr.bf16.mxu0 0
    %971 = vmatpush1.bf16.xpose.msra.mxu0 0
    %972 = vmatprep.subr.bf16.mxu0 0
    %973 = vmatpush1.bf16.xpose.msra.mxu0 0
    %974 = vmatprep.subr.bf16.mxu0 0
    %975 = vmatpush1.bf16.xpose.msra.mxu0 0
    %976 = vmatprep.subr.bf16.mxu0 0
    %977 = vmatpush1.bf16.xpose.msra.mxu0 0
    %978 = vmatprep.subr.bf16.mxu0 0
    %979 = vmatpush1.bf16.xpose.msra.mxu0 0
    %980 = vmatprep.subr.bf16.mxu0 0
    %981 = vmatpush1.bf16.xpose.msra.mxu0 0
    %982 = vmatprep.subr.bf16.mxu0 0
    %983 = vmatpush1.bf16.xpose.msra.mxu0 0
    %984 = vmatprep.mubr.bf16.mxu0 0
    %985 = vmatmul.mubr.bf16.gmra.mrb[0].mxu0 %v947
    %v986 = vpop.f32.mrb[0].mxu0
    %v987 = vadd.f32 %v831, %v986
    %v988 = vpop.f32.mrb[0].mxu0
    %v989 = vpop.f32.mrb[0].mxu0
    %v990 = vpop.f32.mrb[0].mxu0
    %991 = vdwg.mxu0
    %v992 = vsel %vm389, %v987, -inf
    %993 = vmax.xlane.f32.xlu0 %v992
    %v994 = vpop.xlane.xlu0 %993
    %v995 = vsub.f32 %v987, %v994
    %v996 = vmul.f32 %v995, 1.442695
    %v997 = vpow.pop %v996
    %v998 = vsel %vm389, %v997, 0.0
    %999 = vadd.xlane.f32.xlu0 %v998
    %v1000 = vpop.xlane.xlu0 %999
    %v1001 = vrcp.pop %v1000
    %v1002 = vmul.f32 %v997, %v1001
    %v1003 = vpack.c.bf16 %v1002, %v1002
    %1004 = vrot.lane.b32.xlu0 %v384, 88
    %v1005 = vpop.permute.xlu0 %1004
    %v1007 = vsel %vm389, %v1003, 0
    %v1010 = vsel %vm451, %v1005, 0
    %1012 = vmatprep.subr.bf16.mxu0 0
    %1013 = vmatpush1.bf16.msra.mxu0 %v1010
    %1014 = vmatprep.subr.bf16.mxu0 0
    %1015 = vmatpush1.bf16.msra.mxu0 0
    %1016 = vmatprep.subr.bf16.mxu0 0
    %1017 = vmatpush1.bf16.msra.mxu0 0
    %1018 = vmatprep.subr.bf16.mxu0 0
    %1019 = vmatpush1.bf16.msra.mxu0 0
    %1020 = vmatprep.subr.bf16.mxu0 0
    %1021 = vmatpush1.bf16.msra.mxu0 0
    %1022 = vmatprep.subr.bf16.mxu0 0
    %1023 = vmatpush1.bf16.msra.mxu0 0
    %1024 = vmatprep.subr.bf16.mxu0 0
    %1025 = vmatpush1.bf16.msra.mxu0 0
    %1026 = vmatprep.subr.bf16.mxu0 0
    %1027 = vmatpush1.bf16.msra.mxu0 0
    %1028 = vmatprep.subr.bf16.mxu0 0
    %1029 = vmatpush1.bf16.msra.mxu0 0
    %1030 = vmatprep.subr.bf16.mxu0 0
    %1031 = vmatpush1.bf16.msra.mxu0 0
    %1032 = vmatprep.subr.bf16.mxu0 0
    %1033 = vmatpush1.bf16.msra.mxu0 0
    %1034 = vmatprep.subr.bf16.mxu0 0
    %1035 = vmatpush1.bf16.msra.mxu0 0
    %1036 = vmatprep.subr.bf16.mxu0 0
    %1037 = vmatpush1.bf16.msra.mxu0 0
    %1038 = vmatprep.subr.bf16.mxu0 0
    %1039 = vmatpush1.bf16.msra.mxu0 0
    %1040 = vmatprep.subr.bf16.mxu0 0
    %1041 = vmatpush1.bf16.msra.mxu0 0
    %1042 = vmatprep.subr.bf16.mxu0 0
    %1043 = vmatpush1.bf16.msra.mxu0 0
    %1044 = vmatprep.mubr.bf16.mxu0 0
    %1045 = vmatmul.mubr.bf16.gmra.mrb[0].mxu0 %v1007
    %v1046 = vpop.f32.mrb[0].mxu0
    %v1047 = vadd.f32 0.0, %v1046
    %v1048 = vpop.f32.mrb[0].mxu0
    %v1049 = vpop.f32.mrb[0].mxu0
    %v1050 = vpop.f32.mrb[0].mxu0
    %1051 = vdwg.mxu0
    %1052 = vrot.lane.b32.xlu0 %v382, 80
    %v1053 = vpop.permute.xlu0 %1052
    %1054 = vrot.lane.b32.xlu0 %v383, 80
    %v1055 = vpop.permute.xlu0 %1054
    %v1057 = vsel %vm389, %v1053, 0
    %v1060 = vsel %vm389, %v1055, 0
    %1062 = vmatprep.subr.bf16.mxu0 0
    %1063 = vmatpush1.bf16.xpose.msra.mxu0 %v1060
    %1064 = vmatprep.subr.bf16.mxu0 0
    %1065 = vmatpush1.bf16.xpose.msra.mxu0 0
    %1066 = vmatprep.subr.bf16.mxu0 0
    %1067 = vmatpush1.bf16.xpose.msra.mxu0 0
    %1068 = vmatprep.subr.bf16.mxu0 0
    %1069 = vmatpush1.bf16.xpose.msra.mxu0 0
    %1070 = vmatprep.subr.bf16.mxu0 0
    %1071 = vmatpush1.bf16.xpose.msra.mxu0 0
    %1072 = vmatprep.subr.bf16.mxu0 0
    %1073 = vmatpush1.bf16.xpose.msra.mxu0 0
    %1074 = vmatprep.subr.bf16.mxu0 0
    %1075 = vmatpush1.bf16.xpose.msra.mxu0 0
    %1076 = vmatprep.subr.bf16.mxu0 0
    %1077 = vmatpush1.bf16.xpose.msra.mxu0 0
    %1078 = vmatprep.subr.bf16.mxu0 0
    %1079 = vmatpush1.bf16.xpose.msra.mxu0 0
    %1080 = vmatprep.subr.bf16.mxu0 0
    %1081 = vmatpush1.bf16.xpose.msra.mxu0 0
    %1082 = vmatprep.subr.bf16.mxu0 0
    %1083 = vmatpush1.bf16.xpose.msra.mxu0 0
    %1084 = vmatprep.subr.bf16.mxu0 0
    %1085 = vmatpush1.bf16.xpose.msra.mxu0 0
    %1086 = vmatprep.subr.bf16.mxu0 0
    %1087 = vmatpush1.bf16.xpose.msra.mxu0 0
    %1088 = vmatprep.subr.bf16.mxu0 0
    %1089 = vmatpush1.bf16.xpose.msra.mxu0 0
    %1090 = vmatprep.subr.bf16.mxu0 0
    %1091 = vmatpush1.bf16.xpose.msra.mxu0 0
    %1092 = vmatprep.subr.bf16.mxu0 0
    %1093 = vmatpush1.bf16.xpose.msra.mxu0 0
    %1094 = vmatprep.mubr.bf16.mxu0 0
    %1095 = vmatmul.mubr.bf16.gmra.mrb[0].mxu0 %v1057
    %v1096 = vpop.f32.mrb[0].mxu0
    %v1097 = vadd.f32 %v831, %v1096
    %v1098 = vpop.f32.mrb[0].mxu0
    %v1099 = vpop.f32.mrb[0].mxu0
    %v1100 = vpop.f32.mrb[0].mxu0
    %1101 = vdwg.mxu0
    %v1102 = vsel %vm389, %v1097, -inf
    %1103 = vmax.xlane.f32.xlu0 %v1102
    %v1104 = vpop.xlane.xlu0 %1103
    %v1105 = vsub.f32 %v1097, %v1104
    %v1106 = vmul.f32 %v1105, 1.442695
    %v1107 = vpow.pop %v1106
    %v1108 = vsel %vm389, %v1107, 0.0
    %1109 = vadd.xlane.f32.xlu0 %v1108
    %v1110 = vpop.xlane.xlu0 %1109
    %v1111 = vrcp.pop %v1110
    %v1112 = vmul.f32 %v1107, %v1111
    %v1113 = vpack.c.bf16 %v1112, %v1112
    %1114 = vrot.lane.b32.xlu0 %v384, 80
    %v1115 = vpop.permute.xlu0 %1114
    %v1117 = vsel %vm389, %v1113, 0
    %v1120 = vsel %vm451, %v1115, 0
    %1122 = vmatprep.subr.bf16.mxu0 0
    %1123 = vmatpush1.bf16.msra.mxu0 %v1120
    %1124 = vmatprep.subr.bf16.mxu0 0
    %1125 = vmatpush1.bf16.msra.mxu0 0
    %1126 = vmatprep.subr.bf16.mxu0 0
    %1127 = vmatpush1.bf16.msra.mxu0 0
    %1128 = vmatprep.subr.bf16.mxu0 0
    %1129 = vmatpush1.bf16.msra.mxu0 0
    %1130 = vmatprep.subr.bf16.mxu0 0
    %1131 = vmatpush1.bf16.msra.mxu0 0
    %1132 = vmatprep.subr.bf16.mxu0 0
    %1133 = vmatpush1.bf16.msra.mxu0 0
    %1134 = vmatprep.subr.bf16.mxu0 0
    %1135 = vmatpush1.bf16.msra.mxu0 0
    %1136 = vmatprep.subr.bf16.mxu0 0
    %1137 = vmatpush1.bf16.msra.mxu0 0
    %1138 = vmatprep.subr.bf16.mxu0 0
    %1139 = vmatpush1.bf16.msra.mxu0 0
    %1140 = vmatprep.subr.bf16.mxu0 0
    %1141 = vmatpush1.bf16.msra.mxu0 0
    %1142 = vmatprep.subr.bf16.mxu0 0
    %1143 = vmatpush1.bf16.msra.mxu0 0
    %1144 = vmatprep.subr.bf16.mxu0 0
    %1145 = vmatpush1.bf16.msra.mxu0 0
    %1146 = vmatprep.subr.bf16.mxu0 0
    %1147 = vmatpush1.bf16.msra.mxu0 0
    %1148 = vmatprep.subr.bf16.mxu0 0
    %1149 = vmatpush1.bf16.msra.mxu0 0
    %1150 = vmatprep.subr.bf16.mxu0 0
    %1151 = vmatpush1.bf16.msra.mxu0 0
    %1152 = vmatprep.subr.bf16.mxu0 0
    %1153 = vmatpush1.bf16.msra.mxu0 0
    %1154 = vmatprep.mubr.bf16.mxu0 0
    %1155 = vmatmul.mubr.bf16.gmra.mrb[0].mxu0 %v1117
    %v1156 = vpop.f32.mrb[0].mxu0
    %v1157 = vadd.f32 0.0, %v1156
    %v1158 = vpop.f32.mrb[0].mxu0
    %v1159 = vpop.f32.mrb[0].mxu0
    %v1160 = vpop.f32.mrb[0].mxu0
    %1161 = vdwg.mxu0
    %1162 = vrot.lane.b32.xlu0 %v382, 72
    %v1163 = vpop.permute.xlu0 %1162
    %1164 = vrot.lane.b32.xlu0 %v383, 72
    %v1165 = vpop.permute.xlu0 %1164
    %v1167 = vsel %vm389, %v1163, 0
    %v1170 = vsel %vm389, %v1165, 0
    %1172 = vmatprep.subr.bf16.mxu0 0
    %1173 = vmatpush1.bf16.xpose.msra.mxu0 %v1170
    %1174 = vmatprep.subr.bf16.mxu0 0
    %1175 = vmatpush1.bf16.xpose.msra.mxu0 0
    %1176 = vmatprep.subr.bf16.mxu0 0
    %1177 = vmatpush1.bf16.xpose.msra.mxu0 0
    %1178 = vmatprep.subr.bf16.mxu0 0
    %1179 = vmatpush1.bf16.xpose.msra.mxu0 0
    %1180 = vmatprep.subr.bf16.mxu0 0
    %1181 = vmatpush1.bf16.xpose.msra.mxu0 0
    %1182 = vmatprep.subr.bf16.mxu0 0
    %1183 = vmatpush1.bf16.xpose.msra.mxu0 0
    %1184 = vmatprep.subr.bf16.mxu0 0
    %1185 = vmatpush1.bf16.xpose.msra.mxu0 0
    %1186 = vmatprep.subr.bf16.mxu0 0
    %1187 = vmatpush1.bf16.xpose.msra.mxu0 0
    %1188 = vmatprep.subr.bf16.mxu0 0
    %1189 = vmatpush1.bf16.xpose.msra.mxu0 0
    %1190 = vmatprep.subr.bf16.mxu0 0
    %1191 = vmatpush1.bf16.xpose.msra.mxu0 0
    %1192 = vmatprep.subr.bf16.mxu0 0
    %1193 = vmatpush1.bf16.xpose.msra.mxu0 0
    %1194 = vmatprep.subr.bf16.mxu0 0
    %1195 = vmatpush1.bf16.xpose.msra.mxu0 0
    %1196 = vmatprep.subr.bf16.mxu0 0
    %1197 = vmatpush1.bf16.xpose.msra.mxu0 0
    %1198 = vmatprep.subr.bf16.mxu0 0
    %1199 = vmatpush1.bf16.xpose.msra.mxu0 0
    %1200 = vmatprep.subr.bf16.mxu0 0
    %1201 = vmatpush1.bf16.xpose.msra.mxu0 0
    %1202 = vmatprep.subr.bf16.mxu0 0
    %1203 = vmatpush1.bf16.xpose.msra.mxu0 0
    %1204 = vmatprep.mubr.bf16.mxu0 0
    %1205 = vmatmul.mubr.bf16.gmra.mrb[0].mxu0 %v1167
    %v1206 = vpop.f32.mrb[0].mxu0
    %v1207 = vadd.f32 %v831, %v1206
    %v1208 = vpop.f32.mrb[0].mxu0
    %v1209 = vpop.f32.mrb[0].mxu0
    %v1210 = vpop.f32.mrb[0].mxu0
    %1211 = vdwg.mxu0
    %v1212 = vsel %vm389, %v1207, -inf
    %1213 = vmax.xlane.f32.xlu0 %v1212
    %v1214 = vpop.xlane.xlu0 %1213
    %v1215 = vsub.f32 %v1207, %v1214
    %v1216 = vmul.f32 %v1215, 1.442695
    %v1217 = vpow.pop %v1216
    %v1218 = vsel %vm389, %v1217, 0.0
    %1219 = vadd.xlane.f32.xlu0 %v1218
    %v1220 = vpop.xlane.xlu0 %1219
    %v1221 = vrcp.pop %v1220
    %v1222 = vmul.f32 %v1217, %v1221
    %v1223 = vpack.c.bf16 %v1222, %v1222
    %1224 = vrot.lane.b32.xlu0 %v384, 72
    %v1225 = vpop.permute.xlu0 %1224
    %v1227 = vsel %vm389, %v1223, 0
    %v1230 = vsel %vm451, %v1225, 0
    %1232 = vmatprep.subr.bf16.mxu0 0
    %1233 = vmatpush1.bf16.msra.mxu0 %v1230
    %1234 = vmatprep.subr.bf16.mxu0 0
    %1235 = vmatpush1.bf16.msra.mxu0 0
    %1236 = vmatprep.subr.bf16.mxu0 0
    %1237 = vmatpush1.bf16.msra.mxu0 0
    %1238 = vmatprep.subr.bf16.mxu0 0
    %1239 = vmatpush1.bf16.msra.mxu0 0
    %1240 = vmatprep.subr.bf16.mxu0 0
    %1241 = vmatpush1.bf16.msra.mxu0 0
    %1242 = vmatprep.subr.bf16.mxu0 0
    %1243 = vmatpush1.bf16.msra.mxu0 0
    %1244 = vmatprep.subr.bf16.mxu0 0
    %1245 = vmatpush1.bf16.msra.mxu0 0
    %1246 = vmatprep.subr.bf16.mxu0 0
    %1247 = vmatpush1.bf16.msra.mxu0 0
    %1248 = vmatprep.subr.bf16.mxu0 0
    %1249 = vmatpush1.bf16.msra.mxu0 0
    %1250 = vmatprep.subr.bf16.mxu0 0
    %1251 = vmatpush1.bf16.msra.mxu0 0
    %1252 = vmatprep.subr.bf16.mxu0 0
    %1253 = vmatpush1.bf16.msra.mxu0 0
    %1254 = vmatprep.subr.bf16.mxu0 0
    %1255 = vmatpush1.bf16.msra.mxu0 0
    %1256 = vmatprep.subr.bf16.mxu0 0
    %1257 = vmatpush1.bf16.msra.mxu0 0
    %1258 = vmatprep.subr.bf16.mxu0 0
    %1259 = vmatpush1.bf16.msra.mxu0 0
    %1260 = vmatprep.subr.bf16.mxu0 0
    %1261 = vmatpush1.bf16.msra.mxu0 0
    %1262 = vmatprep.subr.bf16.mxu0 0
    %1263 = vmatpush1.bf16.msra.mxu0 0
    %1264 = vmatprep.mubr.bf16.mxu0 0
    %1265 = vmatmul.mubr.bf16.gmra.mrb[0].mxu0 %v1227
    %v1266 = vpop.f32.mrb[0].mxu0
    %v1267 = vadd.f32 0.0, %v1266
    %v1268 = vpop.f32.mrb[0].mxu0
    %v1269 = vpop.f32.mrb[0].mxu0
    %v1270 = vpop.f32.mrb[0].mxu0
    %1271 = vdwg.mxu0
    %1273 = vrot.lane.b32.xlu0 %v603, 8
    %v1274 = vpop.permute.xlu0 %1273
    %1277 = vrot.lane.b32.xlu0 %v713, 16
    %v1278 = vpop.permute.xlu0 %1277
    %1281 = vrot.lane.b32.xlu0 %v823, 24
    %v1282 = vpop.permute.xlu0 %1281
    %1285 = vrot.lane.b32.xlu0 %v937, 32
    %v1286 = vpop.permute.xlu0 %1285
    %1289 = vrot.lane.b32.xlu0 %v1047, 40
    %v1290 = vpop.permute.xlu0 %1289
    %1293 = vrot.lane.b32.xlu0 %v1157, 48
    %v1294 = vpop.permute.xlu0 %1293
    %1297 = vrot.lane.b32.xlu0 %v1267, 56
    %v1298 = vpop.permute.xlu0 %1297
    %v1300 = vsel %vm389, %v490, %v1274
    %vm1301 = vcmask 130048
    %v1302 = vsel %vm1301, %v1300, %v1278
    %vm1303 = vcmask 195584
    %v1304 = vsel %vm1303, %v1302, %v1282
    %vm1305 = vcmask 261120
    %v1306 = vsel %vm1305, %v1304, %v1286
    %vm1307 = vcmask 326656
    %v1308 = vsel %vm1307, %v1306, %v1290
    %vm1309 = vcmask 392192
    %v1310 = vsel %vm1309, %v1308, %v1294
    %vm1311 = vcmask 457728
    %v1312 = vsel %vm1311, %v1310, %v1298
    %v1313 = vpack.c.bf16 %v1312, %v1312
    %v1314 = vld [vmem:[#allocation13] sm:$0xf]
    %v1315 = vld [vmem:[#allocation13 + $0x4] sm:$0xf]
    %v1316 = vld [vmem:[#allocation13 + $0x8] sm:$0xf]
    %v1317 = vld [vmem:[#allocation13 + $0xc] sm:$0xf]
    %v1318 = vld [vmem:[#allocation13 + $0x10] sm:$0xf]
    %v1319 = vld [vmem:[#allocation13 + $0x14] sm:$0xf]
    %v1320 = vld [vmem:[#allocation13 + $0x18] sm:$0xf]
    %v1321 = vld [vmem:[#allocation13 + $0x1c] sm:$0xf]
    %v1322 = vld [vmem:[%s10] sm:$0x1]
    %v1324 = vlaneseq
    %v1325 = vshrl.u32 %v1324, 7
    %v1326 = vsub.s32 0, %v1325
    %v1327 = vrot.slane %v1322, %v1326
    %v1337 = vunpack.c.l.b16 %v1314
    %v1338 = vunpack.c.l.b16 %v1315
    %v1339 = vunpack.c.l.b16 %v1316
    %v1340 = vunpack.c.l.b16 %v1317
    %v1341 = vunpack.c.l.b16 %v1318
    %v1342 = vunpack.c.l.b16 %v1319
    %v1343 = vunpack.c.l.b16 %v1320
    %v1344 = vunpack.c.l.b16 %v1321
    %v1345 = vpack.c.b16 %v1338, %v1337
    %v1346 = vpack.c.b16 %v1340, %v1339
    %v1347 = vpack.c.b16 %v1342, %v1341
    %v1348 = vpack.c.b16 %v1344, %v1343
    %v1354 = vsel %vm177, %v1313, 0
    %1356 = vmatprep.subr.bf16.mxu0 0
    %1357 = vmatpush1.bf16.msra.mxu0 %v1345
    %1358 = vmatprep.subr.bf16.mxu0 0
    %1359 = vmatpush1.bf16.msra.mxu0 %v1346
    %1360 = vmatprep.subr.bf16.mxu0 0
    %1361 = vmatpush1.bf16.msra.mxu0 %v1347
    %1362 = vmatprep.subr.bf16.mxu0 0
    %1363 = vmatpush1.bf16.msra.mxu0 %v1348
    %1364 = vmatprep.subr.bf16.mxu0 0
    %1365 = vmatpush1.bf16.msra.mxu0 0
    %1366 = vmatprep.subr.bf16.mxu0 0
    %1367 = vmatpush1.bf16.msra.mxu0 0
    %1368 = vmatprep.subr.bf16.mxu0 0
    %1369 = vmatpush1.bf16.msra.mxu0 0
    %1370 = vmatprep.subr.bf16.mxu0 0
    %1371 = vmatpush1.bf16.msra.mxu0 0
    %1372 = vmatprep.subr.bf16.mxu0 0
    %1373 = vmatpush1.bf16.msra.mxu0 0
    %1374 = vmatprep.subr.bf16.mxu0 0
    %1375 = vmatpush1.bf16.msra.mxu0 0
    %1376 = vmatprep.subr.bf16.mxu0 0
    %1377 = vmatpush1.bf16.msra.mxu0 0
    %1378 = vmatprep.subr.bf16.mxu0 0
    %1379 = vmatpush1.bf16.msra.mxu0 0
    %1380 = vmatprep.subr.bf16.mxu0 0
    %1381 = vmatpush1.bf16.msra.mxu0 0
    %1382 = vmatprep.subr.bf16.mxu0 0
    %1383 = vmatpush1.bf16.msra.mxu0 0
    %1384 = vmatprep.subr.bf16.mxu0 0
    %1385 = vmatpush1.bf16.msra.mxu0 0
    %1386 = vmatprep.subr.bf16.mxu0 0
    %1387 = vmatpush1.bf16.msra.mxu0 0
    %1388 = vmatprep.mubr.bf16.mxu0 0
    %1389 = vmatmul.mubr.bf16.gmra.mrb[0].mxu0 %v1354
    %v1390 = vpop.f32.mrb[0].mxu0
    %v1391 = vadd.f32 %v1327, %v1390
    %v1392 = vpop.f32.mrb[0].mxu0
    %v1393 = vpop.f32.mrb[0].mxu0
    %v1394 = vpop.f32.mrb[0].mxu0
    %1395 = vdwg.mxu0
    %v1396 = vpack.c.bf16 %v1391, %v1391
    %v1397 = vld [vmem:[%s11] sm:$0xf]
    %v1398 = vld [vmem:[%s11 + $0x4] sm:$0xf]
    %v1399 = vld [vmem:[%s11 + $0x8] sm:$0xf]
    %v1400 = vld [vmem:[%s11 + $0xc] sm:$0xf]
    %v1401 = vld [vmem:[%s11 + $0x10] sm:$0xf]
    %v1402 = vld [vmem:[%s11 + $0x14] sm:$0xf]
    %v1403 = vld [vmem:[%s11 + $0x18] sm:$0xf]
    %v1404 = vld [vmem:[%s11 + $0x1c] sm:$0xf]
    %v1405 = vld [vmem:[%s12] sm:$0x1]
    %v1407 = vlaneseq
    %v1408 = vshrl.u32 %v1407, 7
    %v1409 = vsub.s32 0, %v1408
    %v1410 = vrot.slane %v1405, %v1409
    %v1420 = vunpack.c.l.b16 %v1397
    %v1421 = vunpack.c.l.b16 %v1398
    %v1422 = vunpack.c.l.b16 %v1399
    %v1423 = vunpack.c.l.b16 %v1400
    %v1424 = vunpack.c.l.b16 %v1401
    %v1425 = vunpack.c.l.b16 %v1402
    %v1426 = vunpack.c.l.b16 %v1403
    %v1427 = vunpack.c.l.b16 %v1404
    %v1428 = vpack.c.b16 %v1421, %v1420
    %v1429 = vpack.c.b16 %v1423, %v1422
    %v1430 = vpack.c.b16 %v1425, %v1424
    %v1431 = vpack.c.b16 %v1427, %v1426
    %v1437 = vsel %vm177, %v1396, 0
    %1439 = vmatprep.subr.bf16.mxu0 0
    %1440 = vmatpush1.bf16.msra.mxu0 %v1428
    %1441 = vmatprep.subr.bf16.mxu0 0
    %1442 = vmatpush1.bf16.msra.mxu0 %v1429
    %1443 = vmatprep.subr.bf16.mxu0 0
    %1444 = vmatpush1.bf16.msra.mxu0 %v1430
    %1445 = vmatprep.subr.bf16.mxu0 0
    %1446 = vmatpush1.bf16.msra.mxu0 %v1431
    %1447 = vmatprep.subr.bf16.mxu0 0
    %1448 = vmatpush1.bf16.msra.mxu0 0
    %1449 = vmatprep.subr.bf16.mxu0 0
    %1450 = vmatpush1.bf16.msra.mxu0 0
    %1451 = vmatprep.subr.bf16.mxu0 0
    %1452 = vmatpush1.bf16.msra.mxu0 0
    %1453 = vmatprep.subr.bf16.mxu0 0
    %1454 = vmatpush1.bf16.msra.mxu0 0
    %1455 = vmatprep.subr.bf16.mxu0 0
    %1456 = vmatpush1.bf16.msra.mxu0 0
    %1457 = vmatprep.subr.bf16.mxu0 0
    %1458 = vmatpush1.bf16.msra.mxu0 0
    %1459 = vmatprep.subr.bf16.mxu0 0
    %1460 = vmatpush1.bf16.msra.mxu0 0
    %1461 = vmatprep.subr.bf16.mxu0 0
    %1462 = vmatpush1.bf16.msra.mxu0 0
    %1463 = vmatprep.subr.bf16.mxu0 0
    %1464 = vmatpush1.bf16.msra.mxu0 0
    %1465 = vmatprep.subr.bf16.mxu0 0
    %1466 = vmatpush1.bf16.msra.mxu0 0
    %1467 = vmatprep.subr.bf16.mxu0 0
    %1468 = vmatpush1.bf16.msra.mxu0 0
    %1469 = vmatprep.subr.bf16.mxu0 0
    %1470 = vmatpush1.bf16.msra.mxu0 0
    %1471 = vmatprep.mubr.bf16.mxu0 0
    %1472 = vmatmul.mubr.bf16.gmra.mrb[0].mxu0 %v1437
    %v1473 = vpop.f32.mrb[0].mxu0
    %v1474 = vadd.f32 %v1410, %v1473
    %v1475 = vpop.f32.mrb[0].mxu0
    %v1476 = vpop.f32.mrb[0].mxu0
    %v1477 = vpop.f32.mrb[0].mxu0
    %1478 = vdwg.mxu0
    %v1479 = vsel %vm1305, %v1474, -inf
    %v1480 = vrot.slane %v1479, 4
    %v1481 = vmax.f32 %v1479, %v1480
    %v1482 = vrot.slane %v1481, 2
    %v1483 = vmax.f32 %v1481, %v1482
    %v1484 = vrot.slane %v1483, 1
    %v1485 = vmax.f32 %v1483, %v1484
    %v1486 = vsub.f32 %v1474, %v1485
    %v1487 = vmul.f32 %v1486, 1.442695
    %v1488 = vpow.pop %v1487
    %v1489 = vsel %vm1305, %v1488, 0.0
    %v1490 = vrot.slane %v1489, 4
    %v1491 = vadd.f32 %v1489, %v1490
    %v1492 = vrot.slane %v1491, 2
    %v1493 = vadd.f32 %v1491, %v1492
    %v1494 = vrot.slane %v1493, 1
    %v1495 = vadd.f32 %v1493, %v1494
    %v1496 = vrcp.pop %v1495
    %v1497 = vmul.f32 %v1488, %v1496
    %1498 = vst.msk [vmem:[#allocation14] sm:$0xff] %vm1305, %v1497
    // Predicated region
    $region82: #{tpu_custom_call.1} parent=1 // pred_check
      _
    $region83: #{tpu_custom_call.1} parent=1 // pred_check_branch
      %1500 = sbr.rel (0) target = $region85
    $region84: #{tpu_custom_call.1} parent=1 // pred_region
      %s1502 = ssub.s32 128, 128
      %1503 = vsyncadd [#allocation4], %s1502
      %s1505 = sshll.u32 [#allocation14], 4
      %s1506 = int_to_ptr.vmem [resolvable:$true] %s1505
      %1508 = dma.vmem_to_hbm [thread:$0]  %s1506, 128, %s13, [#allocation4]
    $region85: #{tpu_custom_call.1} parent=1 // pred_fallthru
      _
    // Predicated region
    $region86: #{tpu_custom_call.1} parent=1 // pred_check
      _
    $region87: #{tpu_custom_call.1} parent=1 // pred_check_branch
      %1510 = sbr.rel (0) target = $region89
    $region88: #{tpu_custom_call.1} parent=1 // pred_region
      %1511 = dma.done [#allocation4], 128
    $region89: #{tpu_custom_call.1} parent=1 // pred_fallthru
      _
    %1512 = vsyncpa [#allocation3], 1
    %1513 = vsyncpa [#allocation6], 1
    %1514 = vsyncpa [#allocation9], 1
    %1515 = vsyncpa [#allocation12], 1
    %1516 = vsyncpa [#allocation4], 1

</llo_original>
